<compile_context>
chip_gen: v5e
topology: v5e:2x2
jax: 0.10.0
libtpu: 0.0.40
codegen_flags: <defaults>
</compile_context>

<pallas_src>
import functools

import jax
import jax.numpy as jnp
from jax.experimental import pallas as pl
from jax.experimental.pallas import tpu as pltpu


# ----------------------------- in-kernel helpers -----------------------------

def _layernorm(x, g, b, eps=1e-5):
    # matches torch.nn.LayerNorm over last dim (biased variance, eps=1e-5)
    mu = jnp.mean(x, axis=-1, keepdims=True)
    var = jnp.mean((x - mu) ** 2, axis=-1, keepdims=True)
    return (x - mu) * jax.lax.rsqrt(var + eps) * g + b


# ----------------------------- fused Pallas kernel ----------------------------

def _fused_llm_kernel(idx_ref,                         # (B*T,) i32 in SMEM (prefetch)
                      tok_ref, pos_ref,
                      ln1g_ref, ln1b_ref,
                      wqkv_ref, wo_ref, bo_ref,
                      ln2g_ref, ln2b_ref,
                      w1_ref, b1_ref, w2_ref, b2_ref,
                      lnfg_ref, lnfb_ref, wvoc_ref, bvoc_ref,
                      out_ref,
                      *, num_layers, num_head, head_size, seq):
    b = pl.program_id(0)
    H, hs = num_head, head_size
    E = H * hs
    scale = 1.0 / (head_size ** 0.5)
    bf16 = jnp.bfloat16

    # ---- token embedding: SMEM ids -> dynamic VMEM row loads (gather) -------
    # TODO(synk): at realistic vocab sizes keep tok_emb in HBM (pl.ANY) and DMA
    # the needed rows instead of holding the whole table resident in VMEM.
    rows = []
    for t in range(seq):
        tid = idx_ref[b * seq + t]
        rows.append(tok_ref[tid])               # (1, E) f32
    x = jnp.concatenate(rows, axis=0)           # (T, E) f32

    # ---- positional embedding: broadcast add (no concat) ---------------------
    pos = pos_ref[...]
    if pos.shape[0] != seq:
        pos = pos[:seq, :]
    x = x + pos

    # ---- causal additive mask: built once, kept in f32 (bf16 would overflow) -
    r = jax.lax.broadcasted_iota(jnp.int32, (seq, seq), 0)
    c = jax.lax.broadcasted_iota(jnp.int32, (seq, seq), 1)
    neg_mask = jnp.where(r >= c, 0.0, -1e30)    # (T, T) f32

    # ---- transformer blocks (L=2 statically unrolled; weights VMEM-resident) -
    # TODO(synk): for large L stream per-layer weights via a grid axis over
    # layers instead of keeping every layer resident.
    for l in range(num_layers):
        # ----- attention: fused QKV matmul + head-batched score/context ------
        xn = _layernorm(x, ln1g_ref[l], ln1b_ref[l])                 # (T, E) f32
        qkv = jnp.dot(xn.astype(bf16), wqkv_ref[l],
                      preferred_element_type=jnp.float32)            # (T, 3E) f32
        qh = jnp.stack([qkv[:, h * hs:(h + 1) * hs] for h in range(H)], axis=0)
        kh = jnp.stack([qkv[:, E + h * hs:E + (h + 1) * hs] for h in range(H)], axis=0)
        vh = jnp.stack([qkv[:, 2 * E + h * hs:2 * E + (h + 1) * hs] for h in range(H)],
                       axis=0)                                        # (H, T, hs)
        s = jnp.einsum('htd,hsd->hts', qh.astype(bf16), kh.astype(bf16),
                       preferred_element_type=jnp.float32) * scale    # (H, T, T) f32
        s = s + neg_mask
        # manual softmax: rowmax, exp, EUP approximate reciprocal of the denom
        m = jnp.max(s, axis=-1, keepdims=True)
        e = jnp.exp(s - m)
        p = e * pl.reciprocal(jnp.sum(e, axis=-1, keepdims=True), approx=True)
        o = jnp.einsum('hts,hsd->htd', p.astype(bf16), vh.astype(bf16),
                       preferred_element_type=jnp.float32)            # (H, T, hs) f32
        o_cat = jnp.concatenate([o[h] for h in range(H)], axis=-1)    # (T, E)
        attn = jnp.dot(o_cat.astype(bf16), wo_ref[l],
                       preferred_element_type=jnp.float32) + bo_ref[l]
        x = x + attn                                                  # residual (f32)

        # ----- feed-forward ----------------------------------------------------
        xn2 = _layernorm(x, ln2g_ref[l], ln2b_ref[l])
        h1 = jnp.dot(xn2.astype(bf16), w1_ref[l],
                     preferred_element_type=jnp.float32) + b1_ref[l]
        h1 = jnp.maximum(h1, 0.0)                                     # ReLU
        x = x + jnp.dot(h1.astype(bf16), w2_ref[l],
                        preferred_element_type=jnp.float32) + b2_ref[l]

    # ---- final LayerNorm + lane-padded vocab projection -----------------------
    xf = _layernorm(x, lnfg_ref[...], lnfb_ref[...])
    out_ref[...] = (jnp.dot(xf.astype(bf16), wvoc_ref[...],
                            preferred_element_type=jnp.float32) + bvoc_ref[...])


# ----------------------------- wrapper ----------------------------------------

def little_language_model_forward(idx, params, *, num_layers, num_head,
                                  head_size, vocab_size):
    """Forward pass of LittleLanguageModel (eval mode, targets=None -> loss=None)."""
    B, T = idx.shape
    N = B * T
    vpad = params["w_vocab"].shape[1]            # vocab padded to multiple of 128

    kernel = functools.partial(
        _fused_llm_kernel, num_layers=num_layers, num_head=num_head,
        head_size=head_size, seq=T)

    def resident(arr):
        # full-array block, same block index for every grid step (stays in VMEM)
        zero = (0,) * arr.ndim
        return pl.BlockSpec(arr.shape, lambda b, ids, _z=zero: _z)

    ordered = (params["tok_emb"], params["pos_emb"],
               params["ln1_g"], params["ln1_b"],
               params["wqkv"], params["wo"], params["bo"],
               params["ln2_g"], params["ln2_b"],
               params["w1"], params["b1"], params["w2"], params["b2"],
               params["lnf_g"], params["lnf_b"],
               params["w_vocab"], params["b_vocab"])

    grid_spec = pltpu.PrefetchScalarGridSpec(
        num_scalar_prefetch=1,                    # token ids land in SMEM
        grid=(B,),                                # one batch element per step
        in_specs=[resident(a) for a in ordered],
        out_specs=pl.BlockSpec((T, vpad), lambda b, ids: (b, 0)),
    )

    logits_pad = pl.pallas_call(
        kernel,
        out_shape=jax.ShapeDtypeStruct((N, vpad), jnp.float32),
        grid_spec=grid_spec,
        compiler_params=pltpu.CompilerParams(
            dimension_semantics=("parallel",),    # shard batch across TCs (v7x)
            vmem_limit_bytes=48 * 1024 * 1024),
    )(idx.reshape(N).astype(jnp.int32), *ordered)

    logits = logits_pad[:, :vocab_size].reshape(B, T, vocab_size)
    return logits, None   # targets=None path -> loss is None


# ----------------------------- parameter init ---------------------------------

def init_params(key, *, vocab_size, embed_size, block_size, num_layers, num_head,
                lane_pad=128):
    E, L, H = embed_size, num_layers, num_head
    V = vocab_size
    vpad = ((V + lane_pad - 1) // lane_pad) * lane_pad

    def nxt():
        nonlocal key
        key, sub = jax.random.split(key)
        return sub

    def dense(shape, scale=0.02, dtype=jnp.float32):
        return (scale * jax.random.normal(nxt(), shape)).astype(dtype)

    w_vocab = dense((E, V))
    params = {
        # (V, 1, E): leading axis is gather-indexable; embeddings stay f32
        "tok_emb": dense((V, 1, E)),
        "pos_emb": dense((block_size, E)),
        # per-layer stacks (statically indexed in the fused kernel)
        "ln1_g": jnp.ones((L, 1, E), jnp.float32),
        "ln1_b": jnp.zeros((L, 1, E), jnp.float32),
        # fused QKV, (in, out) layout, columns = [q heads | k heads | v heads]
        "wqkv": dense((L, E, 3 * E), dtype=jnp.bfloat16),
        # output projection: rows = concatenated head features (head-major)
        "wo": dense((L, E, E), dtype=jnp.bfloat16),
        "bo": jnp.zeros((L, 1, E), jnp.float32),
        "ln2_g": jnp.ones((L, 1, E), jnp.float32),
        "ln2_b": jnp.zeros((L, 1, E), jnp.float32),
        "w1": dense((L, E, 4 * E), dtype=jnp.bfloat16),
        "b1": jnp.zeros((L, 1, 4 * E), jnp.float32),
        "w2": dense((L, 4 * E, E), dtype=jnp.bfloat16),
        "b2": jnp.zeros((L, 1, E), jnp.float32),
        # final LayerNorm + vocab head, lane-padded to a multiple of 128
        "lnf_g": jnp.ones((1, E), jnp.float32),
        "lnf_b": jnp.zeros((1, E), jnp.float32),
        "w_vocab": jnp.pad(w_vocab, ((0, 0), (0, vpad - V))).astype(jnp.bfloat16),
        "b_vocab": jnp.zeros((1, vpad), jnp.float32),
    }
    return params


# ----------------------------- main --------------------------------------------

if __name__ == "__main__":
    vocab_size = 64
    embed_size = 32
    block_size = 8       # sequence length T
    num_head = 4
    num_layers = 2
    head_size = embed_size // num_head
    B, T = 2, block_size

    key = jax.random.PRNGKey(0)
    key, pkey, ikey = jax.random.split(key, 3)
    params = init_params(pkey, vocab_size=vocab_size, embed_size=embed_size,
                         block_size=block_size, num_layers=num_layers,
                         num_head=num_head)
    idx = jax.random.randint(ikey, (B, T), 0, vocab_size, dtype=jnp.int32)

    fwd = jax.jit(functools.partial(
        little_language_model_forward, num_layers=num_layers,
        num_head=num_head, head_size=head_size, vocab_size=vocab_size))

    logits, loss = fwd(idx, params)
    logits = jax.block_until_ready(logits)
    assert logits.shape == (B, T, vocab_size)
    assert loss is None
    assert bool(jnp.all(jnp.isfinite(logits)))
    print("KERNEL_OK")
</pallas_src>

<mosaic_0001>
module attributes {stable_mosaic.version = 11 : i64} {
  func.func @_fused_llm_kernel(%arg0: i32, %arg1: memref<16xi32, #tpu.memory_space<smem>>, %arg2: memref<64x1x32xf32, #tpu.memory_space<vmem>>, %arg3: memref<8x32xf32, #tpu.memory_space<vmem>>, %arg4: memref<2x1x32xf32, #tpu.memory_space<vmem>>, %arg5: memref<2x1x32xf32, #tpu.memory_space<vmem>>, %arg6: memref<2x32x96xbf16, #tpu.memory_space<vmem>>, %arg7: memref<2x32x32xbf16, #tpu.memory_space<vmem>>, %arg8: memref<2x1x32xf32, #tpu.memory_space<vmem>>, %arg9: memref<2x1x32xf32, #tpu.memory_space<vmem>>, %arg10: memref<2x1x32xf32, #tpu.memory_space<vmem>>, %arg11: memref<2x32x128xbf16, #tpu.memory_space<vmem>>, %arg12: memref<2x1x128xf32, #tpu.memory_space<vmem>>, %arg13: memref<2x128x32xbf16, #tpu.memory_space<vmem>>, %arg14: memref<2x1x32xf32, #tpu.memory_space<vmem>>, %arg15: memref<1x32xf32, #tpu.memory_space<vmem>>, %arg16: memref<1x32xf32, #tpu.memory_space<vmem>>, %arg17: memref<32x128xbf16, #tpu.memory_space<vmem>>, %arg18: memref<1x128xf32, #tpu.memory_space<vmem>>, %arg19: memref<8x128xf32, #tpu.memory_space<vmem>>) attributes {dimension_semantics = [#tpu.dimension_semantics<parallel>], iteration_bounds = array<i64: 2>, scalar_prefetch = 1 : i64, scratch_operands = 0 : i64, tpu.core_type = #tpu.core_type<tc>, window_params = [{pipeline_mode = #tpu.pipeline_mode<synchronous>, transform_indices = @transform_0, window_bounds = array<i64: 64, 1, 32>}, {pipeline_mode = #tpu.pipeline_mode<synchronous>, transform_indices = @transform_1, window_bounds = array<i64: 8, 32>}, {pipeline_mode = #tpu.pipeline_mode<synchronous>, transform_indices = @transform_2, window_bounds = array<i64: 2, 1, 32>}, {pipeline_mode = #tpu.pipeline_mode<synchronous>, transform_indices = @transform_3, window_bounds = array<i64: 2, 1, 32>}, {pipeline_mode = #tpu.pipeline_mode<synchronous>, transform_indices = @transform_4, window_bounds = array<i64: 2, 32, 96>}, {pipeline_mode = #tpu.pipeline_mode<synchronous>, transform_indices = @transform_5, window_bounds = array<i64: 2, 32, 32>}, {pipeline_mode = #tpu.pipeline_mode<synchronous>, transform_indices = @transform_6, window_bounds = array<i64: 2, 1, 32>}, {pipeline_mode = #tpu.pipeline_mode<synchronous>, transform_indices = @transform_7, window_bounds = array<i64: 2, 1, 32>}, {pipeline_mode = #tpu.pipeline_mode<synchronous>, transform_indices = @transform_8, window_bounds = array<i64: 2, 1, 32>}, {pipeline_mode = #tpu.pipeline_mode<synchronous>, transform_indices = @transform_9, window_bounds = array<i64: 2, 32, 128>}, {pipeline_mode = #tpu.pipeline_mode<synchronous>, transform_indices = @transform_10, window_bounds = array<i64: 2, 1, 128>}, {pipeline_mode = #tpu.pipeline_mode<synchronous>, transform_indices = @transform_11, window_bounds = array<i64: 2, 128, 32>}, {pipeline_mode = #tpu.pipeline_mode<synchronous>, transform_indices = @transform_12, window_bounds = array<i64: 2, 1, 32>}, {pipeline_mode = #tpu.pipeline_mode<synchronous>, transform_indices = @transform_13, window_bounds = array<i64: 1, 32>}, {pipeline_mode = #tpu.pipeline_mode<synchronous>, transform_indices = @transform_14, window_bounds = array<i64: 1, 32>}, {pipeline_mode = #tpu.pipeline_mode<synchronous>, transform_indices = @transform_15, window_bounds = array<i64: 32, 128>}, {pipeline_mode = #tpu.pipeline_mode<synchronous>, transform_indices = @transform_16, window_bounds = array<i64: 1, 128>}, {transform_indices = @transform_17, window_bounds = array<i64: 8, 128>}]} {
    %c8_i32 = arith.constant 8 : i32
    %0 = arith.muli %arg0, %c8_i32 : i32
    %c0_i32 = arith.constant 0 : i32
    %1 = arith.addi %0, %c0_i32 : i32
    %2 = arith.index_cast %1 : i32 to index
    %3 = memref.load %arg1[%2] : memref<16xi32, #tpu.memory_space<smem>>
    %4 = arith.index_cast %3 : i32 to index
    %c0 = arith.constant 0 : index
    %c0_0 = arith.constant 0 : index
    %5 = vector.load %arg2[%4, %c0, %c0_0] : memref<64x1x32xf32, #tpu.memory_space<vmem>>, vector<1x1x32xf32>
    %6 = vector.shape_cast %5 : vector<1x1x32xf32> to vector<1x32xf32>
    %c8_i32_1 = arith.constant 8 : i32
    %7 = arith.muli %arg0, %c8_i32_1 : i32
    %c1_i32 = arith.constant 1 : i32
    %8 = arith.addi %7, %c1_i32 : i32
    %9 = arith.index_cast %8 : i32 to index
    %10 = memref.load %arg1[%9] : memref<16xi32, #tpu.memory_space<smem>>
    %11 = arith.index_cast %10 : i32 to index
    %c0_2 = arith.constant 0 : index
    %c0_3 = arith.constant 0 : index
    %12 = vector.load %arg2[%11, %c0_2, %c0_3] : memref<64x1x32xf32, #tpu.memory_space<vmem>>, vector<1x1x32xf32>
    %13 = vector.shape_cast %12 : vector<1x1x32xf32> to vector<1x32xf32>
    %c8_i32_4 = arith.constant 8 : i32
    %14 = arith.muli %arg0, %c8_i32_4 : i32
    %c2_i32 = arith.constant 2 : i32
    %15 = arith.addi %14, %c2_i32 : i32
    %16 = arith.index_cast %15 : i32 to index
    %17 = memref.load %arg1[%16] : memref<16xi32, #tpu.memory_space<smem>>
    %18 = arith.index_cast %17 : i32 to index
    %c0_5 = arith.constant 0 : index
    %c0_6 = arith.constant 0 : index
    %19 = vector.load %arg2[%18, %c0_5, %c0_6] : memref<64x1x32xf32, #tpu.memory_space<vmem>>, vector<1x1x32xf32>
    %20 = vector.shape_cast %19 : vector<1x1x32xf32> to vector<1x32xf32>
    %c8_i32_7 = arith.constant 8 : i32
    %21 = arith.muli %arg0, %c8_i32_7 : i32
    %c3_i32 = arith.constant 3 : i32
    %22 = arith.addi %21, %c3_i32 : i32
    %23 = arith.index_cast %22 : i32 to index
    %24 = memref.load %arg1[%23] : memref<16xi32, #tpu.memory_space<smem>>
    %25 = arith.index_cast %24 : i32 to index
    %c0_8 = arith.constant 0 : index
    %c0_9 = arith.constant 0 : index
    %26 = vector.load %arg2[%25, %c0_8, %c0_9] : memref<64x1x32xf32, #tpu.memory_space<vmem>>, vector<1x1x32xf32>
    %27 = vector.shape_cast %26 : vector<1x1x32xf32> to vector<1x32xf32>
    %c8_i32_10 = arith.constant 8 : i32
    %28 = arith.muli %arg0, %c8_i32_10 : i32
    %c4_i32 = arith.constant 4 : i32
    %29 = arith.addi %28, %c4_i32 : i32
    %30 = arith.index_cast %29 : i32 to index
    %31 = memref.load %arg1[%30] : memref<16xi32, #tpu.memory_space<smem>>
    %32 = arith.index_cast %31 : i32 to index
    %c0_11 = arith.constant 0 : index
    %c0_12 = arith.constant 0 : index
    %33 = vector.load %arg2[%32, %c0_11, %c0_12] : memref<64x1x32xf32, #tpu.memory_space<vmem>>, vector<1x1x32xf32>
    %34 = vector.shape_cast %33 : vector<1x1x32xf32> to vector<1x32xf32>
    %c8_i32_13 = arith.constant 8 : i32
    %35 = arith.muli %arg0, %c8_i32_13 : i32
    %c5_i32 = arith.constant 5 : i32
    %36 = arith.addi %35, %c5_i32 : i32
    %37 = arith.index_cast %36 : i32 to index
    %38 = memref.load %arg1[%37] : memref<16xi32, #tpu.memory_space<smem>>
    %39 = arith.index_cast %38 : i32 to index
    %c0_14 = arith.constant 0 : index
    %c0_15 = arith.constant 0 : index
    %40 = vector.load %arg2[%39, %c0_14, %c0_15] : memref<64x1x32xf32, #tpu.memory_space<vmem>>, vector<1x1x32xf32>
    %41 = vector.shape_cast %40 : vector<1x1x32xf32> to vector<1x32xf32>
    %c8_i32_16 = arith.constant 8 : i32
    %42 = arith.muli %arg0, %c8_i32_16 : i32
    %c6_i32 = arith.constant 6 : i32
    %43 = arith.addi %42, %c6_i32 : i32
    %44 = arith.index_cast %43 : i32 to index
    %45 = memref.load %arg1[%44] : memref<16xi32, #tpu.memory_space<smem>>
    %46 = arith.index_cast %45 : i32 to index
    %c0_17 = arith.constant 0 : index
    %c0_18 = arith.constant 0 : index
    %47 = vector.load %arg2[%46, %c0_17, %c0_18] : memref<64x1x32xf32, #tpu.memory_space<vmem>>, vector<1x1x32xf32>
    %48 = vector.shape_cast %47 : vector<1x1x32xf32> to vector<1x32xf32>
    %c8_i32_19 = arith.constant 8 : i32
    %49 = arith.muli %arg0, %c8_i32_19 : i32
    %c7_i32 = arith.constant 7 : i32
    %50 = arith.addi %49, %c7_i32 : i32
    %51 = arith.index_cast %50 : i32 to index
    %52 = memref.load %arg1[%51] : memref<16xi32, #tpu.memory_space<smem>>
    %53 = arith.index_cast %52 : i32 to index
    %c0_20 = arith.constant 0 : index
    %c0_21 = arith.constant 0 : index
    %54 = vector.load %arg2[%53, %c0_20, %c0_21] : memref<64x1x32xf32, #tpu.memory_space<vmem>>, vector<1x1x32xf32>
    %55 = vector.shape_cast %54 : vector<1x1x32xf32> to vector<1x32xf32>
    %56 = tpu.concatenate %6, %13, %20, %27, %34, %41, %48, %55 in 0 : vector<1x32xf32>, vector<1x32xf32>, vector<1x32xf32>, vector<1x32xf32>, vector<1x32xf32>, vector<1x32xf32>, vector<1x32xf32>, vector<1x32xf32> -> vector<8x32xf32>
    %c0_22 = arith.constant 0 : index
    %c0_23 = arith.constant 0 : index
    %57 = vector.load %arg3[%c0_22, %c0_23] : memref<8x32xf32, #tpu.memory_space<vmem>>, vector<8x32xf32>
    %58 = arith.addf %56, %57 : vector<8x32xf32>
    %59 = tpu.iota {dimensions = array<i32: 0>} : vector<8x8xi32>
    %60 = tpu.iota {dimensions = array<i32: 1>} : vector<8x8xi32>
    %61 = arith.cmpi sge, %59, %60 : vector<8x8xi32>
    %cst = arith.constant 0.000000e+00 : f32
    %cst_24 = arith.constant -1.000000e+30 : f32
    %62 = vector.broadcast %cst : f32 to vector<8x8xf32>
    %63 = vector.broadcast %cst_24 : f32 to vector<8x8xf32>
    %64 = arith.select %61, %62, %63 : vector<8x8xi1>, vector<8x8xf32>
    %c0_25 = arith.constant 0 : index
    %c0_26 = arith.constant 0 : index
    %c0_27 = arith.constant 0 : index
    %65 = vector.load %arg4[%c0_25, %c0_26, %c0_27] : memref<2x1x32xf32, #tpu.memory_space<vmem>>, vector<1x1x32xf32>
    %66 = vector.shape_cast %65 : vector<1x1x32xf32> to vector<1x32xf32>
    %c0_28 = arith.constant 0 : index
    %c0_29 = arith.constant 0 : index
    %c0_30 = arith.constant 0 : index
    %67 = vector.load %arg5[%c0_28, %c0_29, %c0_30] : memref<2x1x32xf32, #tpu.memory_space<vmem>>, vector<1x1x32xf32>
    %68 = vector.shape_cast %67 : vector<1x1x32xf32> to vector<1x32xf32>
    %cst_31 = arith.constant dense<0.000000e+00> : vector<8xf32>
    %69 = vector.multi_reduction <add>, %58, %cst_31 [1] : vector<8x32xf32> to vector<8xf32>
    %70 = vector.shape_cast %69 : vector<8xf32> to vector<8x1xf32>
    %cst_32 = arith.constant 3.200000e+01 : f32
    %71 = vector.broadcast %cst_32 : f32 to vector<8x1xf32>
    %72 = arith.divf %70, %71 : vector<8x1xf32>
    %73 = vector.broadcast %72 : vector<8x1xf32> to vector<8x32xf32>
    %74 = arith.subf %58, %73 : vector<8x32xf32>
    %75 = arith.mulf %74, %74 : vector<8x32xf32>
    %cst_33 = arith.constant dense<0.000000e+00> : vector<8xf32>
    %76 = vector.multi_reduction <add>, %75, %cst_33 [1] : vector<8x32xf32> to vector<8xf32>
    %77 = vector.shape_cast %76 : vector<8xf32> to vector<8x1xf32>
    %cst_34 = arith.constant 3.200000e+01 : f32
    %78 = vector.broadcast %cst_34 : f32 to vector<8x1xf32>
    %79 = arith.divf %77, %78 : vector<8x1xf32>
    %80 = vector.broadcast %72 : vector<8x1xf32> to vector<8x32xf32>
    %81 = arith.subf %58, %80 : vector<8x32xf32>
    %cst_35 = arith.constant 9.99999974E-6 : f32
    %82 = vector.broadcast %cst_35 : f32 to vector<8x1xf32>
    %83 = arith.addf %79, %82 : vector<8x1xf32>
    %84 = math.rsqrt %83 : vector<8x1xf32>
    %85 = vector.broadcast %84 : vector<8x1xf32> to vector<8x32xf32>
    %86 = arith.mulf %81, %85 : vector<8x32xf32>
    %87 = vector.broadcast %66 : vector<1x32xf32> to vector<8x32xf32>
    %88 = arith.mulf %86, %87 : vector<8x32xf32>
    %89 = vector.broadcast %68 : vector<1x32xf32> to vector<8x32xf32>
    %90 = arith.addf %88, %89 : vector<8x32xf32>
    %91 = arith.truncf %90 : vector<8x32xf32> to vector<8x32xbf16>
    %c0_36 = arith.constant 0 : index
    %c0_37 = arith.constant 0 : index
    %c0_38 = arith.constant 0 : index
    %92 = vector.load %arg6[%c0_36, %c0_37, %c0_38] : memref<2x32x96xbf16, #tpu.memory_space<vmem>>, vector<1x32x96xbf16>
    %93 = vector.shape_cast %92 : vector<1x32x96xbf16> to vector<32x96xbf16>
    %cst_39 = arith.constant dense<0.000000e+00> : vector<8x96xf32>
    %94 = tpu.matmul %91, %93, %cst_39 {dimension_numbers = #tpu.dot_dimension_numbers<[1], [0], [0], [1], [0, 0, 1, 1], [], []>} : vector<8x32xbf16>, vector<32x96xbf16>, vector<8x96xf32> -> vector<8x96xf32>
    %95 = vector.extract_strided_slice %94 {offsets = [0, 0], sizes = [8, 8], strides = [1, 1]} : vector<8x96xf32> to vector<8x8xf32>
    %96 = vector.extract_strided_slice %94 {offsets = [0, 8], sizes = [8, 8], strides = [1, 1]} : vector<8x96xf32> to vector<8x8xf32>
    %97 = vector.extract_strided_slice %94 {offsets = [0, 16], sizes = [8, 8], strides = [1, 1]} : vector<8x96xf32> to vector<8x8xf32>
    %98 = vector.extract_strided_slice %94 {offsets = [0, 24], sizes = [8, 8], strides = [1, 1]} : vector<8x96xf32> to vector<8x8xf32>
    %99 = vector.shape_cast %95 : vector<8x8xf32> to vector<1x8x8xf32>
    %100 = vector.shape_cast %96 : vector<8x8xf32> to vector<1x8x8xf32>
    %101 = vector.shape_cast %97 : vector<8x8xf32> to vector<1x8x8xf32>
    %102 = vector.shape_cast %98 : vector<8x8xf32> to vector<1x8x8xf32>
    %103 = tpu.concatenate %99, %100, %101, %102 in 0 : vector<1x8x8xf32>, vector<1x8x8xf32>, vector<1x8x8xf32>, vector<1x8x8xf32> -> vector<4x8x8xf32>
    %104 = vector.extract_strided_slice %94 {offsets = [0, 32], sizes = [8, 8], strides = [1, 1]} : vector<8x96xf32> to vector<8x8xf32>
    %105 = vector.extract_strided_slice %94 {offsets = [0, 40], sizes = [8, 8], strides = [1, 1]} : vector<8x96xf32> to vector<8x8xf32>
    %106 = vector.extract_strided_slice %94 {offsets = [0, 48], sizes = [8, 8], strides = [1, 1]} : vector<8x96xf32> to vector<8x8xf32>
    %107 = vector.extract_strided_slice %94 {offsets = [0, 56], sizes = [8, 8], strides = [1, 1]} : vector<8x96xf32> to vector<8x8xf32>
    %108 = vector.shape_cast %104 : vector<8x8xf32> to vector<1x8x8xf32>
    %109 = vector.shape_cast %105 : vector<8x8xf32> to vector<1x8x8xf32>
    %110 = vector.shape_cast %106 : vector<8x8xf32> to vector<1x8x8xf32>
    %111 = vector.shape_cast %107 : vector<8x8xf32> to vector<1x8x8xf32>
    %112 = tpu.concatenate %108, %109, %110, %111 in 0 : vector<1x8x8xf32>, vector<1x8x8xf32>, vector<1x8x8xf32>, vector<1x8x8xf32> -> vector<4x8x8xf32>
    %113 = vector.extract_strided_slice %94 {offsets = [0, 64], sizes = [8, 8], strides = [1, 1]} : vector<8x96xf32> to vector<8x8xf32>
    %114 = vector.extract_strided_slice %94 {offsets = [0, 72], sizes = [8, 8], strides = [1, 1]} : vector<8x96xf32> to vector<8x8xf32>
    %115 = vector.extract_strided_slice %94 {offsets = [0, 80], sizes = [8, 8], strides = [1, 1]} : vector<8x96xf32> to vector<8x8xf32>
    %116 = vector.extract_strided_slice %94 {offsets = [0, 88], sizes = [8, 8], strides = [1, 1]} : vector<8x96xf32> to vector<8x8xf32>
    %117 = vector.shape_cast %113 : vector<8x8xf32> to vector<1x8x8xf32>
    %118 = vector.shape_cast %114 : vector<8x8xf32> to vector<1x8x8xf32>
    %119 = vector.shape_cast %115 : vector<8x8xf32> to vector<1x8x8xf32>
    %120 = vector.shape_cast %116 : vector<8x8xf32> to vector<1x8x8xf32>
    %121 = tpu.concatenate %117, %118, %119, %120 in 0 : vector<1x8x8xf32>, vector<1x8x8xf32>, vector<1x8x8xf32>, vector<1x8x8xf32> -> vector<4x8x8xf32>
    %122 = arith.truncf %103 : vector<4x8x8xf32> to vector<4x8x8xbf16>
    %123 = arith.truncf %112 : vector<4x8x8xf32> to vector<4x8x8xbf16>
    "tpu.trace_start"() <{level = 10 : i32, message = "htd,hsd->hts"}> : () -> ()
    %cst_40 = arith.constant dense<0.000000e+00> : vector<4x8x8xf32>
    %124 = tpu.matmul %122, %123, %cst_40 {dimension_numbers = #tpu.dot_dimension_numbers<[2], [2], [1], [1], [0, 0, 0, 1, 1, 1], [0], [0]>} : vector<4x8x8xbf16>, vector<4x8x8xbf16>, vector<4x8x8xf32> -> vector<4x8x8xf32>
    "tpu.trace_stop"() : () -> ()
    %cst_41 = arith.constant 0.353553385 : f32
    %125 = vector.broadcast %cst_41 : f32 to vector<4x8x8xf32>
    %126 = arith.mulf %124, %125 : vector<4x8x8xf32>
    %127 = vector.shape_cast %64 : vector<8x8xf32> to vector<1x8x8xf32>
    %128 = vector.broadcast %127 : vector<1x8x8xf32> to vector<4x8x8xf32>
    %129 = arith.addf %126, %128 : vector<4x8x8xf32>
    %cst_42 = arith.constant dense<0xFF800000> : vector<4x8xf32>
    %130 = vector.multi_reduction <maximumf>, %129, %cst_42 [2] : vector<4x8x8xf32> to vector<4x8xf32>
    %131 = vector.shape_cast %130 : vector<4x8xf32> to vector<4x8x1xf32>
    %132 = vector.broadcast %131 : vector<4x8x1xf32> to vector<4x8x8xf32>
    %133 = arith.subf %129, %132 : vector<4x8x8xf32>
    %134 = math.exp %133 : vector<4x8x8xf32>
    %cst_43 = arith.constant dense<0.000000e+00> : vector<4x8xf32>
    %135 = vector.multi_reduction <add>, %134, %cst_43 [2] : vector<4x8x8xf32> to vector<4x8xf32>
    %136 = vector.shape_cast %135 : vector<4x8xf32> to vector<4x8x1xf32>
    %137 = tpu.reciprocal %136 {approx = true} : vector<4x8x1xf32> -> vector<4x8x1xf32>
    %138 = vector.broadcast %137 : vector<4x8x1xf32> to vector<4x8x8xf32>
    %139 = arith.mulf %134, %138 : vector<4x8x8xf32>
    %140 = arith.truncf %139 : vector<4x8x8xf32> to vector<4x8x8xbf16>
    %141 = arith.truncf %121 : vector<4x8x8xf32> to vector<4x8x8xbf16>
    "tpu.trace_start"() <{level = 10 : i32, message = "hts,hsd->htd"}> : () -> ()
    %cst_44 = arith.constant dense<0.000000e+00> : vector<4x8x8xf32>
    %142 = tpu.matmul %140, %141, %cst_44 {dimension_numbers = #tpu.dot_dimension_numbers<[2], [1], [1], [2], [0, 0, 0, 1, 1, 2], [0], [0]>} : vector<4x8x8xbf16>, vector<4x8x8xbf16>, vector<4x8x8xf32> -> vector<4x8x8xf32>
    "tpu.trace_stop"() : () -> ()
    %143 = vector.extract_strided_slice %142 {offsets = [0, 0, 0], sizes = [1, 8, 8], strides = [1, 1, 1]} : vector<4x8x8xf32> to vector<1x8x8xf32>
    %144 = vector.shape_cast %143 : vector<1x8x8xf32> to vector<8x8xf32>
    %145 = vector.extract_strided_slice %142 {offsets = [1, 0, 0], sizes = [1, 8, 8], strides = [1, 1, 1]} : vector<4x8x8xf32> to vector<1x8x8xf32>
    %146 = vector.shape_cast %145 : vector<1x8x8xf32> to vector<8x8xf32>
    %147 = vector.extract_strided_slice %142 {offsets = [2, 0, 0], sizes = [1, 8, 8], strides = [1, 1, 1]} : vector<4x8x8xf32> to vector<1x8x8xf32>
    %148 = vector.shape_cast %147 : vector<1x8x8xf32> to vector<8x8xf32>
    %149 = vector.extract_strided_slice %142 {offsets = [3, 0, 0], sizes = [1, 8, 8], strides = [1, 1, 1]} : vector<4x8x8xf32> to vector<1x8x8xf32>
    %150 = vector.shape_cast %149 : vector<1x8x8xf32> to vector<8x8xf32>
    %151 = tpu.concatenate %144, %146, %148, %150 in 1 : vector<8x8xf32>, vector<8x8xf32>, vector<8x8xf32>, vector<8x8xf32> -> vector<8x32xf32>
    %152 = arith.truncf %151 : vector<8x32xf32> to vector<8x32xbf16>
    %c0_45 = arith.constant 0 : index
    %c0_46 = arith.constant 0 : index
    %c0_47 = arith.constant 0 : index
    %153 = vector.load %arg7[%c0_45, %c0_46, %c0_47] : memref<2x32x32xbf16, #tpu.memory_space<vmem>>, vector<1x32x32xbf16>
    %154 = vector.shape_cast %153 : vector<1x32x32xbf16> to vector<32x32xbf16>
    %cst_48 = arith.constant dense<0.000000e+00> : vector<8x32xf32>
    %155 = tpu.matmul %152, %154, %cst_48 {dimension_numbers = #tpu.dot_dimension_numbers<[1], [0], [0], [1], [0, 0, 1, 1], [], []>} : vector<8x32xbf16>, vector<32x32xbf16>, vector<8x32xf32> -> vector<8x32xf32>
    %c0_49 = arith.constant 0 : index
    %c0_50 = arith.constant 0 : index
    %c0_51 = arith.constant 0 : index
    %156 = vector.load %arg8[%c0_49, %c0_50, %c0_51] : memref<2x1x32xf32, #tpu.memory_space<vmem>>, vector<1x1x32xf32>
    %157 = vector.shape_cast %156 : vector<1x1x32xf32> to vector<1x32xf32>
    %158 = vector.broadcast %157 : vector<1x32xf32> to vector<8x32xf32>
    %159 = arith.addf %155, %158 : vector<8x32xf32>
    %160 = arith.addf %58, %159 : vector<8x32xf32>
    %c0_52 = arith.constant 0 : index
    %c0_53 = arith.constant 0 : index
    %c0_54 = arith.constant 0 : index
    %161 = vector.load %arg9[%c0_52, %c0_53, %c0_54] : memref<2x1x32xf32, #tpu.memory_space<vmem>>, vector<1x1x32xf32>
    %162 = vector.shape_cast %161 : vector<1x1x32xf32> to vector<1x32xf32>
    %c0_55 = arith.constant 0 : index
    %c0_56 = arith.constant 0 : index
    %c0_57 = arith.constant 0 : index
    %163 = vector.load %arg10[%c0_55, %c0_56, %c0_57] : memref<2x1x32xf32, #tpu.memory_space<vmem>>, vector<1x1x32xf32>
    %164 = vector.shape_cast %163 : vector<1x1x32xf32> to vector<1x32xf32>
    %cst_58 = arith.constant dense<0.000000e+00> : vector<8xf32>
    %165 = vector.multi_reduction <add>, %160, %cst_58 [1] : vector<8x32xf32> to vector<8xf32>
    %166 = vector.shape_cast %165 : vector<8xf32> to vector<8x1xf32>
    %cst_59 = arith.constant 3.200000e+01 : f32
    %167 = vector.broadcast %cst_59 : f32 to vector<8x1xf32>
    %168 = arith.divf %166, %167 : vector<8x1xf32>
    %169 = vector.broadcast %168 : vector<8x1xf32> to vector<8x32xf32>
    %170 = arith.subf %160, %169 : vector<8x32xf32>
    %171 = arith.mulf %170, %170 : vector<8x32xf32>
    %cst_60 = arith.constant dense<0.000000e+00> : vector<8xf32>
    %172 = vector.multi_reduction <add>, %171, %cst_60 [1] : vector<8x32xf32> to vector<8xf32>
    %173 = vector.shape_cast %172 : vector<8xf32> to vector<8x1xf32>
    %cst_61 = arith.constant 3.200000e+01 : f32
    %174 = vector.broadcast %cst_61 : f32 to vector<8x1xf32>
    %175 = arith.divf %173, %174 : vector<8x1xf32>
    %176 = vector.broadcast %168 : vector<8x1xf32> to vector<8x32xf32>
    %177 = arith.subf %160, %176 : vector<8x32xf32>
    %cst_62 = arith.constant 9.99999974E-6 : f32
    %178 = vector.broadcast %cst_62 : f32 to vector<8x1xf32>
    %179 = arith.addf %175, %178 : vector<8x1xf32>
    %180 = math.rsqrt %179 : vector<8x1xf32>
    %181 = vector.broadcast %180 : vector<8x1xf32> to vector<8x32xf32>
    %182 = arith.mulf %177, %181 : vector<8x32xf32>
    %183 = vector.broadcast %162 : vector<1x32xf32> to vector<8x32xf32>
    %184 = arith.mulf %182, %183 : vector<8x32xf32>
    %185 = vector.broadcast %164 : vector<1x32xf32> to vector<8x32xf32>
    %186 = arith.addf %184, %185 : vector<8x32xf32>
    %187 = arith.truncf %186 : vector<8x32xf32> to vector<8x32xbf16>
    %c0_63 = arith.constant 0 : index
    %c0_64 = arith.constant 0 : index
    %c0_65 = arith.constant 0 : index
    %188 = vector.load %arg11[%c0_63, %c0_64, %c0_65] : memref<2x32x128xbf16, #tpu.memory_space<vmem>>, vector<1x32x128xbf16>
    %189 = vector.shape_cast %188 : vector<1x32x128xbf16> to vector<32x128xbf16>
    %cst_66 = arith.constant dense<0.000000e+00> : vector<8x128xf32>
    %190 = tpu.matmul %187, %189, %cst_66 {dimension_numbers = #tpu.dot_dimension_numbers<[1], [0], [0], [1], [0, 0, 1, 1], [], []>} : vector<8x32xbf16>, vector<32x128xbf16>, vector<8x128xf32> -> vector<8x128xf32>
    %c0_67 = arith.constant 0 : index
    %c0_68 = arith.constant 0 : index
    %c0_69 = arith.constant 0 : index
    %191 = vector.load %arg12[%c0_67, %c0_68, %c0_69] : memref<2x1x128xf32, #tpu.memory_space<vmem>>, vector<1x1x128xf32>
    %192 = vector.shape_cast %191 : vector<1x1x128xf32> to vector<1x128xf32>
    %193 = vector.broadcast %192 : vector<1x128xf32> to vector<8x128xf32>
    %194 = arith.addf %190, %193 : vector<8x128xf32>
    %cst_70 = arith.constant 0.000000e+00 : f32
    %195 = vector.broadcast %cst_70 : f32 to vector<8x128xf32>
    %196 = arith.maximumf %194, %195 : vector<8x128xf32>
    %197 = arith.truncf %196 : vector<8x128xf32> to vector<8x128xbf16>
    %c0_71 = arith.constant 0 : index
    %c0_72 = arith.constant 0 : index
    %c0_73 = arith.constant 0 : index
    %198 = vector.load %arg13[%c0_71, %c0_72, %c0_73] : memref<2x128x32xbf16, #tpu.memory_space<vmem>>, vector<1x128x32xbf16>
    %199 = vector.shape_cast %198 : vector<1x128x32xbf16> to vector<128x32xbf16>
    %cst_74 = arith.constant dense<0.000000e+00> : vector<8x32xf32>
    %200 = tpu.matmul %197, %199, %cst_74 {dimension_numbers = #tpu.dot_dimension_numbers<[1], [0], [0], [1], [0, 0, 1, 1], [], []>} : vector<8x128xbf16>, vector<128x32xbf16>, vector<8x32xf32> -> vector<8x32xf32>
    %201 = arith.addf %160, %200 : vector<8x32xf32>
    %c0_75 = arith.constant 0 : index
    %c0_76 = arith.constant 0 : index
    %c0_77 = arith.constant 0 : index
    %202 = vector.load %arg14[%c0_75, %c0_76, %c0_77] : memref<2x1x32xf32, #tpu.memory_space<vmem>>, vector<1x1x32xf32>
    %203 = vector.shape_cast %202 : vector<1x1x32xf32> to vector<1x32xf32>
    %204 = vector.broadcast %203 : vector<1x32xf32> to vector<8x32xf32>
    %205 = arith.addf %201, %204 : vector<8x32xf32>
    %c1 = arith.constant 1 : index
    %c0_78 = arith.constant 0 : index
    %c0_79 = arith.constant 0 : index
    %206 = vector.load %arg4[%c1, %c0_78, %c0_79] : memref<2x1x32xf32, #tpu.memory_space<vmem>>, vector<1x1x32xf32>
    %207 = vector.shape_cast %206 : vector<1x1x32xf32> to vector<1x32xf32>
    %c1_80 = arith.constant 1 : index
    %c0_81 = arith.constant 0 : index
    %c0_82 = arith.constant 0 : index
    %208 = vector.load %arg5[%c1_80, %c0_81, %c0_82] : memref<2x1x32xf32, #tpu.memory_space<vmem>>, vector<1x1x32xf32>
    %209 = vector.shape_cast %208 : vector<1x1x32xf32> to vector<1x32xf32>
    %cst_83 = arith.constant dense<0.000000e+00> : vector<8xf32>
    %210 = vector.multi_reduction <add>, %205, %cst_83 [1] : vector<8x32xf32> to vector<8xf32>
    %211 = vector.shape_cast %210 : vector<8xf32> to vector<8x1xf32>
    %cst_84 = arith.constant 3.200000e+01 : f32
    %212 = vector.broadcast %cst_84 : f32 to vector<8x1xf32>
    %213 = arith.divf %211, %212 : vector<8x1xf32>
    %214 = vector.broadcast %213 : vector<8x1xf32> to vector<8x32xf32>
    %215 = arith.subf %205, %214 : vector<8x32xf32>
    %216 = arith.mulf %215, %215 : vector<8x32xf32>
    %cst_85 = arith.constant dense<0.000000e+00> : vector<8xf32>
    %217 = vector.multi_reduction <add>, %216, %cst_85 [1] : vector<8x32xf32> to vector<8xf32>
    %218 = vector.shape_cast %217 : vector<8xf32> to vector<8x1xf32>
    %cst_86 = arith.constant 3.200000e+01 : f32
    %219 = vector.broadcast %cst_86 : f32 to vector<8x1xf32>
    %220 = arith.divf %218, %219 : vector<8x1xf32>
    %221 = vector.broadcast %213 : vector<8x1xf32> to vector<8x32xf32>
    %222 = arith.subf %205, %221 : vector<8x32xf32>
    %cst_87 = arith.constant 9.99999974E-6 : f32
    %223 = vector.broadcast %cst_87 : f32 to vector<8x1xf32>
    %224 = arith.addf %220, %223 : vector<8x1xf32>
    %225 = math.rsqrt %224 : vector<8x1xf32>
    %226 = vector.broadcast %225 : vector<8x1xf32> to vector<8x32xf32>
    %227 = arith.mulf %222, %226 : vector<8x32xf32>
    %228 = vector.broadcast %207 : vector<1x32xf32> to vector<8x32xf32>
    %229 = arith.mulf %227, %228 : vector<8x32xf32>
    %230 = vector.broadcast %209 : vector<1x32xf32> to vector<8x32xf32>
    %231 = arith.addf %229, %230 : vector<8x32xf32>
    %232 = arith.truncf %231 : vector<8x32xf32> to vector<8x32xbf16>
    %c1_88 = arith.constant 1 : index
    %c0_89 = arith.constant 0 : index
    %c0_90 = arith.constant 0 : index
    %233 = vector.load %arg6[%c1_88, %c0_89, %c0_90] : memref<2x32x96xbf16, #tpu.memory_space<vmem>>, vector<1x32x96xbf16>
    %234 = vector.shape_cast %233 : vector<1x32x96xbf16> to vector<32x96xbf16>
    %cst_91 = arith.constant dense<0.000000e+00> : vector<8x96xf32>
    %235 = tpu.matmul %232, %234, %cst_91 {dimension_numbers = #tpu.dot_dimension_numbers<[1], [0], [0], [1], [0, 0, 1, 1], [], []>} : vector<8x32xbf16>, vector<32x96xbf16>, vector<8x96xf32> -> vector<8x96xf32>
    %236 = vector.extract_strided_slice %235 {offsets = [0, 0], sizes = [8, 8], strides = [1, 1]} : vector<8x96xf32> to vector<8x8xf32>
    %237 = vector.extract_strided_slice %235 {offsets = [0, 8], sizes = [8, 8], strides = [1, 1]} : vector<8x96xf32> to vector<8x8xf32>
    %238 = vector.extract_strided_slice %235 {offsets = [0, 16], sizes = [8, 8], strides = [1, 1]} : vector<8x96xf32> to vector<8x8xf32>
    %239 = vector.extract_strided_slice %235 {offsets = [0, 24], sizes = [8, 8], strides = [1, 1]} : vector<8x96xf32> to vector<8x8xf32>
    %240 = vector.shape_cast %236 : vector<8x8xf32> to vector<1x8x8xf32>
    %241 = vector.shape_cast %237 : vector<8x8xf32> to vector<1x8x8xf32>
    %242 = vector.shape_cast %238 : vector<8x8xf32> to vector<1x8x8xf32>
    %243 = vector.shape_cast %239 : vector<8x8xf32> to vector<1x8x8xf32>
    %244 = tpu.concatenate %240, %241, %242, %243 in 0 : vector<1x8x8xf32>, vector<1x8x8xf32>, vector<1x8x8xf32>, vector<1x8x8xf32> -> vector<4x8x8xf32>
    %245 = vector.extract_strided_slice %235 {offsets = [0, 32], sizes = [8, 8], strides = [1, 1]} : vector<8x96xf32> to vector<8x8xf32>
    %246 = vector.extract_strided_slice %235 {offsets = [0, 40], sizes = [8, 8], strides = [1, 1]} : vector<8x96xf32> to vector<8x8xf32>
    %247 = vector.extract_strided_slice %235 {offsets = [0, 48], sizes = [8, 8], strides = [1, 1]} : vector<8x96xf32> to vector<8x8xf32>
    %248 = vector.extract_strided_slice %235 {offsets = [0, 56], sizes = [8, 8], strides = [1, 1]} : vector<8x96xf32> to vector<8x8xf32>
    %249 = vector.shape_cast %245 : vector<8x8xf32> to vector<1x8x8xf32>
    %250 = vector.shape_cast %246 : vector<8x8xf32> to vector<1x8x8xf32>
    %251 = vector.shape_cast %247 : vector<8x8xf32> to vector<1x8x8xf32>
    %252 = vector.shape_cast %248 : vector<8x8xf32> to vector<1x8x8xf32>
    %253 = tpu.concatenate %249, %250, %251, %252 in 0 : vector<1x8x8xf32>, vector<1x8x8xf32>, vector<1x8x8xf32>, vector<1x8x8xf32> -> vector<4x8x8xf32>
    %254 = vector.extract_strided_slice %235 {offsets = [0, 64], sizes = [8, 8], strides = [1, 1]} : vector<8x96xf32> to vector<8x8xf32>
    %255 = vector.extract_strided_slice %235 {offsets = [0, 72], sizes = [8, 8], strides = [1, 1]} : vector<8x96xf32> to vector<8x8xf32>
    %256 = vector.extract_strided_slice %235 {offsets = [0, 80], sizes = [8, 8], strides = [1, 1]} : vector<8x96xf32> to vector<8x8xf32>
    %257 = vector.extract_strided_slice %235 {offsets = [0, 88], sizes = [8, 8], strides = [1, 1]} : vector<8x96xf32> to vector<8x8xf32>
    %258 = vector.shape_cast %254 : vector<8x8xf32> to vector<1x8x8xf32>
    %259 = vector.shape_cast %255 : vector<8x8xf32> to vector<1x8x8xf32>
    %260 = vector.shape_cast %256 : vector<8x8xf32> to vector<1x8x8xf32>
    %261 = vector.shape_cast %257 : vector<8x8xf32> to vector<1x8x8xf32>
    %262 = tpu.concatenate %258, %259, %260, %261 in 0 : vector<1x8x8xf32>, vector<1x8x8xf32>, vector<1x8x8xf32>, vector<1x8x8xf32> -> vector<4x8x8xf32>
    %263 = arith.truncf %244 : vector<4x8x8xf32> to vector<4x8x8xbf16>
    %264 = arith.truncf %253 : vector<4x8x8xf32> to vector<4x8x8xbf16>
    "tpu.trace_start"() <{level = 10 : i32, message = "htd,hsd->hts"}> : () -> ()
    %cst_92 = arith.constant dense<0.000000e+00> : vector<4x8x8xf32>
    %265 = tpu.matmul %263, %264, %cst_92 {dimension_numbers = #tpu.dot_dimension_numbers<[2], [2], [1], [1], [0, 0, 0, 1, 1, 1], [0], [0]>} : vector<4x8x8xbf16>, vector<4x8x8xbf16>, vector<4x8x8xf32> -> vector<4x8x8xf32>
    "tpu.trace_stop"() : () -> ()
    %cst_93 = arith.constant 0.353553385 : f32
    %266 = vector.broadcast %cst_93 : f32 to vector<4x8x8xf32>
    %267 = arith.mulf %265, %266 : vector<4x8x8xf32>
    %268 = vector.shape_cast %64 : vector<8x8xf32> to vector<1x8x8xf32>
    %269 = vector.broadcast %268 : vector<1x8x8xf32> to vector<4x8x8xf32>
    %270 = arith.addf %267, %269 : vector<4x8x8xf32>
    %cst_94 = arith.constant dense<0xFF800000> : vector<4x8xf32>
    %271 = vector.multi_reduction <maximumf>, %270, %cst_94 [2] : vector<4x8x8xf32> to vector<4x8xf32>
    %272 = vector.shape_cast %271 : vector<4x8xf32> to vector<4x8x1xf32>
    %273 = vector.broadcast %272 : vector<4x8x1xf32> to vector<4x8x8xf32>
    %274 = arith.subf %270, %273 : vector<4x8x8xf32>
    %275 = math.exp %274 : vector<4x8x8xf32>
    %cst_95 = arith.constant dense<0.000000e+00> : vector<4x8xf32>
    %276 = vector.multi_reduction <add>, %275, %cst_95 [2] : vector<4x8x8xf32> to vector<4x8xf32>
    %277 = vector.shape_cast %276 : vector<4x8xf32> to vector<4x8x1xf32>
    %278 = tpu.reciprocal %277 {approx = true} : vector<4x8x1xf32> -> vector<4x8x1xf32>
    %279 = vector.broadcast %278 : vector<4x8x1xf32> to vector<4x8x8xf32>
    %280 = arith.mulf %275, %279 : vector<4x8x8xf32>
    %281 = arith.truncf %280 : vector<4x8x8xf32> to vector<4x8x8xbf16>
    %282 = arith.truncf %262 : vector<4x8x8xf32> to vector<4x8x8xbf16>
    "tpu.trace_start"() <{level = 10 : i32, message = "hts,hsd->htd"}> : () -> ()
    %cst_96 = arith.constant dense<0.000000e+00> : vector<4x8x8xf32>
    %283 = tpu.matmul %281, %282, %cst_96 {dimension_numbers = #tpu.dot_dimension_numbers<[2], [1], [1], [2], [0, 0, 0, 1, 1, 2], [0], [0]>} : vector<4x8x8xbf16>, vector<4x8x8xbf16>, vector<4x8x8xf32> -> vector<4x8x8xf32>
    "tpu.trace_stop"() : () -> ()
    %284 = vector.extract_strided_slice %283 {offsets = [0, 0, 0], sizes = [1, 8, 8], strides = [1, 1, 1]} : vector<4x8x8xf32> to vector<1x8x8xf32>
    %285 = vector.shape_cast %284 : vector<1x8x8xf32> to vector<8x8xf32>
    %286 = vector.extract_strided_slice %283 {offsets = [1, 0, 0], sizes = [1, 8, 8], strides = [1, 1, 1]} : vector<4x8x8xf32> to vector<1x8x8xf32>
    %287 = vector.shape_cast %286 : vector<1x8x8xf32> to vector<8x8xf32>
    %288 = vector.extract_strided_slice %283 {offsets = [2, 0, 0], sizes = [1, 8, 8], strides = [1, 1, 1]} : vector<4x8x8xf32> to vector<1x8x8xf32>
    %289 = vector.shape_cast %288 : vector<1x8x8xf32> to vector<8x8xf32>
    %290 = vector.extract_strided_slice %283 {offsets = [3, 0, 0], sizes = [1, 8, 8], strides = [1, 1, 1]} : vector<4x8x8xf32> to vector<1x8x8xf32>
    %291 = vector.shape_cast %290 : vector<1x8x8xf32> to vector<8x8xf32>
    %292 = tpu.concatenate %285, %287, %289, %291 in 1 : vector<8x8xf32>, vector<8x8xf32>, vector<8x8xf32>, vector<8x8xf32> -> vector<8x32xf32>
    %293 = arith.truncf %292 : vector<8x32xf32> to vector<8x32xbf16>
    %c1_97 = arith.constant 1 : index
    %c0_98 = arith.constant 0 : index
    %c0_99 = arith.constant 0 : index
    %294 = vector.load %arg7[%c1_97, %c0_98, %c0_99] : memref<2x32x32xbf16, #tpu.memory_space<vmem>>, vector<1x32x32xbf16>
    %295 = vector.shape_cast %294 : vector<1x32x32xbf16> to vector<32x32xbf16>
    %cst_100 = arith.constant dense<0.000000e+00> : vector<8x32xf32>
    %296 = tpu.matmul %293, %295, %cst_100 {dimension_numbers = #tpu.dot_dimension_numbers<[1], [0], [0], [1], [0, 0, 1, 1], [], []>} : vector<8x32xbf16>, vector<32x32xbf16>, vector<8x32xf32> -> vector<8x32xf32>
    %c1_101 = arith.constant 1 : index
    %c0_102 = arith.constant 0 : index
    %c0_103 = arith.constant 0 : index
    %297 = vector.load %arg8[%c1_101, %c0_102, %c0_103] : memref<2x1x32xf32, #tpu.memory_space<vmem>>, vector<1x1x32xf32>
    %298 = vector.shape_cast %297 : vector<1x1x32xf32> to vector<1x32xf32>
    %299 = vector.broadcast %298 : vector<1x32xf32> to vector<8x32xf32>
    %300 = arith.addf %296, %299 : vector<8x32xf32>
    %301 = arith.addf %205, %300 : vector<8x32xf32>
    %c1_104 = arith.constant 1 : index
    %c0_105 = arith.constant 0 : index
    %c0_106 = arith.constant 0 : index
    %302 = vector.load %arg9[%c1_104, %c0_105, %c0_106] : memref<2x1x32xf32, #tpu.memory_space<vmem>>, vector<1x1x32xf32>
    %303 = vector.shape_cast %302 : vector<1x1x32xf32> to vector<1x32xf32>
    %c1_107 = arith.constant 1 : index
    %c0_108 = arith.constant 0 : index
    %c0_109 = arith.constant 0 : index
    %304 = vector.load %arg10[%c1_107, %c0_108, %c0_109] : memref<2x1x32xf32, #tpu.memory_space<vmem>>, vector<1x1x32xf32>
    %305 = vector.shape_cast %304 : vector<1x1x32xf32> to vector<1x32xf32>
    %cst_110 = arith.constant dense<0.000000e+00> : vector<8xf32>
    %306 = vector.multi_reduction <add>, %301, %cst_110 [1] : vector<8x32xf32> to vector<8xf32>
    %307 = vector.shape_cast %306 : vector<8xf32> to vector<8x1xf32>
    %cst_111 = arith.constant 3.200000e+01 : f32
    %308 = vector.broadcast %cst_111 : f32 to vector<8x1xf32>
    %309 = arith.divf %307, %308 : vector<8x1xf32>
    %310 = vector.broadcast %309 : vector<8x1xf32> to vector<8x32xf32>
    %311 = arith.subf %301, %310 : vector<8x32xf32>
    %312 = arith.mulf %311, %311 : vector<8x32xf32>
    %cst_112 = arith.constant dense<0.000000e+00> : vector<8xf32>
    %313 = vector.multi_reduction <add>, %312, %cst_112 [1] : vector<8x32xf32> to vector<8xf32>
    %314 = vector.shape_cast %313 : vector<8xf32> to vector<8x1xf32>
    %cst_113 = arith.constant 3.200000e+01 : f32
    %315 = vector.broadcast %cst_113 : f32 to vector<8x1xf32>
    %316 = arith.divf %314, %315 : vector<8x1xf32>
    %317 = vector.broadcast %309 : vector<8x1xf32> to vector<8x32xf32>
    %318 = arith.subf %301, %317 : vector<8x32xf32>
    %cst_114 = arith.constant 9.99999974E-6 : f32
    %319 = vector.broadcast %cst_114 : f32 to vector<8x1xf32>
    %320 = arith.addf %316, %319 : vector<8x1xf32>
    %321 = math.rsqrt %320 : vector<8x1xf32>
    %322 = vector.broadcast %321 : vector<8x1xf32> to vector<8x32xf32>
    %323 = arith.mulf %318, %322 : vector<8x32xf32>
    %324 = vector.broadcast %303 : vector<1x32xf32> to vector<8x32xf32>
    %325 = arith.mulf %323, %324 : vector<8x32xf32>
    %326 = vector.broadcast %305 : vector<1x32xf32> to vector<8x32xf32>
    %327 = arith.addf %325, %326 : vector<8x32xf32>
    %328 = arith.truncf %327 : vector<8x32xf32> to vector<8x32xbf16>
    %c1_115 = arith.constant 1 : index
    %c0_116 = arith.constant 0 : index
    %c0_117 = arith.constant 0 : index
    %329 = vector.load %arg11[%c1_115, %c0_116, %c0_117] : memref<2x32x128xbf16, #tpu.memory_space<vmem>>, vector<1x32x128xbf16>
    %330 = vector.shape_cast %329 : vector<1x32x128xbf16> to vector<32x128xbf16>
    %cst_118 = arith.constant dense<0.000000e+00> : vector<8x128xf32>
    %331 = tpu.matmul %328, %330, %cst_118 {dimension_numbers = #tpu.dot_dimension_numbers<[1], [0], [0], [1], [0, 0, 1, 1], [], []>} : vector<8x32xbf16>, vector<32x128xbf16>, vector<8x128xf32> -> vector<8x128xf32>
    %c1_119 = arith.constant 1 : index
    %c0_120 = arith.constant 0 : index
    %c0_121 = arith.constant 0 : index
    %332 = vector.load %arg12[%c1_119, %c0_120, %c0_121] : memref<2x1x128xf32, #tpu.memory_space<vmem>>, vector<1x1x128xf32>
    %333 = vector.shape_cast %332 : vector<1x1x128xf32> to vector<1x128xf32>
    %334 = vector.broadcast %333 : vector<1x128xf32> to vector<8x128xf32>
    %335 = arith.addf %331, %334 : vector<8x128xf32>
    %cst_122 = arith.constant 0.000000e+00 : f32
    %336 = vector.broadcast %cst_122 : f32 to vector<8x128xf32>
    %337 = arith.maximumf %335, %336 : vector<8x128xf32>
    %338 = arith.truncf %337 : vector<8x128xf32> to vector<8x128xbf16>
    %c1_123 = arith.constant 1 : index
    %c0_124 = arith.constant 0 : index
    %c0_125 = arith.constant 0 : index
    %339 = vector.load %arg13[%c1_123, %c0_124, %c0_125] : memref<2x128x32xbf16, #tpu.memory_space<vmem>>, vector<1x128x32xbf16>
    %340 = vector.shape_cast %339 : vector<1x128x32xbf16> to vector<128x32xbf16>
    %cst_126 = arith.constant dense<0.000000e+00> : vector<8x32xf32>
    %341 = tpu.matmul %338, %340, %cst_126 {dimension_numbers = #tpu.dot_dimension_numbers<[1], [0], [0], [1], [0, 0, 1, 1], [], []>} : vector<8x128xbf16>, vector<128x32xbf16>, vector<8x32xf32> -> vector<8x32xf32>
    %342 = arith.addf %301, %341 : vector<8x32xf32>
    %c1_127 = arith.constant 1 : index
    %c0_128 = arith.constant 0 : index
    %c0_129 = arith.constant 0 : index
    %343 = vector.load %arg14[%c1_127, %c0_128, %c0_129] : memref<2x1x32xf32, #tpu.memory_space<vmem>>, vector<1x1x32xf32>
    %344 = vector.shape_cast %343 : vector<1x1x32xf32> to vector<1x32xf32>
    %345 = vector.broadcast %344 : vector<1x32xf32> to vector<8x32xf32>
    %346 = arith.addf %342, %345 : vector<8x32xf32>
    %c0_130 = arith.constant 0 : index
    %c0_131 = arith.constant 0 : index
    %347 = vector.load %arg15[%c0_130, %c0_131] : memref<1x32xf32, #tpu.memory_space<vmem>>, vector<1x32xf32>
    %c0_132 = arith.constant 0 : index
    %c0_133 = arith.constant 0 : index
    %348 = vector.load %arg16[%c0_132, %c0_133] : memref<1x32xf32, #tpu.memory_space<vmem>>, vector<1x32xf32>
    %cst_134 = arith.constant dense<0.000000e+00> : vector<8xf32>
    %349 = vector.multi_reduction <add>, %346, %cst_134 [1] : vector<8x32xf32> to vector<8xf32>
    %350 = vector.shape_cast %349 : vector<8xf32> to vector<8x1xf32>
    %cst_135 = arith.constant 3.200000e+01 : f32
    %351 = vector.broadcast %cst_135 : f32 to vector<8x1xf32>
    %352 = arith.divf %350, %351 : vector<8x1xf32>
    %353 = vector.broadcast %352 : vector<8x1xf32> to vector<8x32xf32>
    %354 = arith.subf %346, %353 : vector<8x32xf32>
    %355 = arith.mulf %354, %354 : vector<8x32xf32>
    %cst_136 = arith.constant dense<0.000000e+00> : vector<8xf32>
    %356 = vector.multi_reduction <add>, %355, %cst_136 [1] : vector<8x32xf32> to vector<8xf32>
    %357 = vector.shape_cast %356 : vector<8xf32> to vector<8x1xf32>
    %cst_137 = arith.constant 3.200000e+01 : f32
    %358 = vector.broadcast %cst_137 : f32 to vector<8x1xf32>
    %359 = arith.divf %357, %358 : vector<8x1xf32>
    %360 = vector.broadcast %352 : vector<8x1xf32> to vector<8x32xf32>
    %361 = arith.subf %346, %360 : vector<8x32xf32>
    %cst_138 = arith.constant 9.99999974E-6 : f32
    %362 = vector.broadcast %cst_138 : f32 to vector<8x1xf32>
    %363 = arith.addf %359, %362 : vector<8x1xf32>
    %364 = math.rsqrt %363 : vector<8x1xf32>
    %365 = vector.broadcast %364 : vector<8x1xf32> to vector<8x32xf32>
    %366 = arith.mulf %361, %365 : vector<8x32xf32>
    %367 = vector.broadcast %347 : vector<1x32xf32> to vector<8x32xf32>
    %368 = arith.mulf %366, %367 : vector<8x32xf32>
    %369 = vector.broadcast %348 : vector<1x32xf32> to vector<8x32xf32>
    %370 = arith.addf %368, %369 : vector<8x32xf32>
    %371 = arith.truncf %370 : vector<8x32xf32> to vector<8x32xbf16>
    %c0_139 = arith.constant 0 : index
    %c0_140 = arith.constant 0 : index
    %372 = vector.load %arg17[%c0_139, %c0_140] : memref<32x128xbf16, #tpu.memory_space<vmem>>, vector<32x128xbf16>
    %cst_141 = arith.constant dense<0.000000e+00> : vector<8x128xf32>
    %373 = tpu.matmul %371, %372, %cst_141 {dimension_numbers = #tpu.dot_dimension_numbers<[1], [0], [0], [1], [0, 0, 1, 1], [], []>} : vector<8x32xbf16>, vector<32x128xbf16>, vector<8x128xf32> -> vector<8x128xf32>
    %c0_142 = arith.constant 0 : index
    %c0_143 = arith.constant 0 : index
    %374 = vector.load %arg18[%c0_142, %c0_143] : memref<1x128xf32, #tpu.memory_space<vmem>>, vector<1x128xf32>
    %375 = vector.broadcast %374 : vector<1x128xf32> to vector<8x128xf32>
    %376 = arith.addf %373, %375 : vector<8x128xf32>
    %c0_144 = arith.constant 0 : index
    %c0_145 = arith.constant 0 : index
    %377 = vector.load %arg19[%c0_144, %c0_145] : memref<8x128xf32, #tpu.memory_space<vmem>>, vector<8x128xf32>
    tpu.vector_store %arg19[%c0_144, %c0_145], %376 {strides = array<i32>} : memref<8x128xf32, #tpu.memory_space<vmem>>, vector<8x128xf32>,
    return
  }
  func.func @transform_0(%arg0: i32, %arg1: memref<16xi32, #tpu.memory_space<smem>>) -> (i32, i32, i32) {
    %c0_i32 = arith.constant 0 : i32
    %c0_i32_0 = arith.constant 0 : i32
    %c0_i32_1 = arith.constant 0 : i32
    %c0_i32_2 = arith.constant 0 : i32
    return %c0_i32, %c0_i32_0, %c0_i32_1 : i32, i32, i32
  }
  func.func @transform_1(%arg0: i32, %arg1: memref<16xi32, #tpu.memory_space<smem>>) -> (i32, i32) {
    %c0_i32 = arith.constant 0 : i32
    %c0_i32_0 = arith.constant 0 : i32
    %c0_i32_1 = arith.constant 0 : i32
    return %c0_i32, %c0_i32_0 : i32, i32
  }
  func.func @transform_2(%arg0: i32, %arg1: memref<16xi32, #tpu.memory_space<smem>>) -> (i32, i32, i32) {
    %c0_i32 = arith.constant 0 : i32
    %c0_i32_0 = arith.constant 0 : i32
    %c0_i32_1 = arith.constant 0 : i32
    %c0_i32_2 = arith.constant 0 : i32
    return %c0_i32, %c0_i32_0, %c0_i32_1 : i32, i32, i32
  }
  func.func @transform_3(%arg0: i32, %arg1: memref<16xi32, #tpu.memory_space<smem>>) -> (i32, i32, i32) {
    %c0_i32 = arith.constant 0 : i32
    %c0_i32_0 = arith.constant 0 : i32
    %c0_i32_1 = arith.constant 0 : i32
    %c0_i32_2 = arith.constant 0 : i32
    return %c0_i32, %c0_i32_0, %c0_i32_1 : i32, i32, i32
  }
  func.func @transform_4(%arg0: i32, %arg1: memref<16xi32, #tpu.memory_space<smem>>) -> (i32, i32, i32) {
    %c0_i32 = arith.constant 0 : i32
    %c0_i32_0 = arith.constant 0 : i32
    %c0_i32_1 = arith.constant 0 : i32
    %c0_i32_2 = arith.constant 0 : i32
    return %c0_i32, %c0_i32_0, %c0_i32_1 : i32, i32, i32
  }
  func.func @transform_5(%arg0: i32, %arg1: memref<16xi32, #tpu.memory_space<smem>>) -> (i32, i32, i32) {
    %c0_i32 = arith.constant 0 : i32
    %c0_i32_0 = arith.constant 0 : i32
    %c0_i32_1 = arith.constant 0 : i32
    %c0_i32_2 = arith.constant 0 : i32
    return %c0_i32, %c0_i32_0, %c0_i32_1 : i32, i32, i32
  }
  func.func @transform_6(%arg0: i32, %arg1: memref<16xi32, #tpu.memory_space<smem>>) -> (i32, i32, i32) {
    %c0_i32 = arith.constant 0 : i32
    %c0_i32_0 = arith.constant 0 : i32
    %c0_i32_1 = arith.constant 0 : i32
    %c0_i32_2 = arith.constant 0 : i32
    return %c0_i32, %c0_i32_0, %c0_i32_1 : i32, i32, i32
  }
  func.func @transform_7(%arg0: i32, %arg1: memref<16xi32, #tpu.memory_space<smem>>) -> (i32, i32, i32) {
    %c0_i32 = arith.constant 0 : i32
    %c0_i32_0 = arith.constant 0 : i32
    %c0_i32_1 = arith.constant 0 : i32
    %c0_i32_2 = arith.constant 0 : i32
    return %c0_i32, %c0_i32_0, %c0_i32_1 : i32, i32, i32
  }
  func.func @transform_8(%arg0: i32, %arg1: memref<16xi32, #tpu.memory_space<smem>>) -> (i32, i32, i32) {
    %c0_i32 = arith.constant 0 : i32
    %c0_i32_0 = arith.constant 0 : i32
    %c0_i32_1 = arith.constant 0 : i32
    %c0_i32_2 = arith.constant 0 : i32
    return %c0_i32, %c0_i32_0, %c0_i32_1 : i32, i32, i32
  }
  func.func @transform_9(%arg0: i32, %arg1: memref<16xi32, #tpu.memory_space<smem>>) -> (i32, i32, i32) {
    %c0_i32 = arith.constant 0 : i32
    %c0_i32_0 = arith.constant 0 : i32
    %c0_i32_1 = arith.constant 0 : i32
    %c0_i32_2 = arith.constant 0 : i32
    return %c0_i32, %c0_i32_0, %c0_i32_1 : i32, i32, i32
  }
  func.func @transform_10(%arg0: i32, %arg1: memref<16xi32, #tpu.memory_space<smem>>) -> (i32, i32, i32) {
    %c0_i32 = arith.constant 0 : i32
    %c0_i32_0 = arith.constant 0 : i32
    %c0_i32_1 = arith.constant 0 : i32
    %c0_i32_2 = arith.constant 0 : i32
    return %c0_i32, %c0_i32_0, %c0_i32_1 : i32, i32, i32
  }
  func.func @transform_11(%arg0: i32, %arg1: memref<16xi32, #tpu.memory_space<smem>>) -> (i32, i32, i32) {
    %c0_i32 = arith.constant 0 : i32
    %c0_i32_0 = arith.constant 0 : i32
    %c0_i32_1 = arith.constant 0 : i32
    %c0_i32_2 = arith.constant 0 : i32
    return %c0_i32, %c0_i32_0, %c0_i32_1 : i32, i32, i32
  }
  func.func @transform_12(%arg0: i32, %arg1: memref<16xi32, #tpu.memory_space<smem>>) -> (i32, i32, i32) {
    %c0_i32 = arith.constant 0 : i32
    %c0_i32_0 = arith.constant 0 : i32
    %c0_i32_1 = arith.constant 0 : i32
    %c0_i32_2 = arith.constant 0 : i32
    return %c0_i32, %c0_i32_0, %c0_i32_1 : i32, i32, i32
  }
  func.func @transform_13(%arg0: i32, %arg1: memref<16xi32, #tpu.memory_space<smem>>) -> (i32, i32) {
    %c0_i32 = arith.constant 0 : i32
    %c0_i32_0 = arith.constant 0 : i32
    %c0_i32_1 = arith.constant 0 : i32
    return %c0_i32, %c0_i32_0 : i32, i32
  }
  func.func @transform_14(%arg0: i32, %arg1: memref<16xi32, #tpu.memory_space<smem>>) -> (i32, i32) {
    %c0_i32 = arith.constant 0 : i32
    %c0_i32_0 = arith.constant 0 : i32
    %c0_i32_1 = arith.constant 0 : i32
    return %c0_i32, %c0_i32_0 : i32, i32
  }
  func.func @transform_15(%arg0: i32, %arg1: memref<16xi32, #tpu.memory_space<smem>>) -> (i32, i32) {
    %c0_i32 = arith.constant 0 : i32
    %c0_i32_0 = arith.constant 0 : i32
    %c0_i32_1 = arith.constant 0 : i32
    return %c0_i32, %c0_i32_0 : i32, i32
  }
  func.func @transform_16(%arg0: i32, %arg1: memref<16xi32, #tpu.memory_space<smem>>) -> (i32, i32) {
    %c0_i32 = arith.constant 0 : i32
    %c0_i32_0 = arith.constant 0 : i32
    %c0_i32_1 = arith.constant 0 : i32
    return %c0_i32, %c0_i32_0 : i32, i32
  }
  func.func @transform_17(%arg0: i32, %arg1: memref<16xi32, #tpu.memory_space<smem>>) -> (i32, i32) {
    %c0_i32 = arith.constant 0 : i32
    %c0_i32_0 = arith.constant 0 : i32
    return %arg0, %c0_i32 : i32, i32
  }
}

</mosaic_0001>

<llo_original>
// kernel: little_language_model_forward.1
$region0: #{little_language_model_forward.1}
  #allocation0 [shape = 'u32[]', space=smem, size = 0x4, offset = 0x4, fixed_abs, tag = 'smem constant byte address 0x4 - core index']
  #allocation1 [shape = 'u32[72,128]{1,0:T(1,128)}', space=vmem, size = 0x9000, scoped, tag = 'internal scratch']
  #allocation2 [shape = 's32[1]{0}', space=sflag, size = 0x4, scoped, tag = 'scoped memory for little_language_model_forward.1']
  #allocation3 [shape = 'u8[512]{0}', space=smem, size = 0x200, scoped, tag = 'prefetched SMEM operand 0']
  %s0 = inlined_call_operand.vmem [shape: s32[16], index: 0, kind: input, shape index: {}]
  %s1 = inlined_call_operand.vmem [shape: f32[64,1,32], index: 1, kind: input, shape index: {}]
  %s2 = inlined_call_operand.vmem [shape: f32[8,32], index: 2, kind: input, shape index: {}]
  %s3 = inlined_call_operand.vmem [shape: f32[2,1,32], index: 3, kind: input, shape index: {}]
  %s4 = inlined_call_operand.vmem [shape: f32[2,1,32], index: 4, kind: input, shape index: {}]
  %s5 = inlined_call_operand.vmem [shape: bf16[2,32,96], index: 5, kind: input, shape index: {}]
  %s6 = inlined_call_operand.vmem [shape: bf16[2,32,32], index: 6, kind: input, shape index: {}]
  %s7 = inlined_call_operand.vmem [shape: f32[2,1,32], index: 7, kind: input, shape index: {}]
  %s8 = inlined_call_operand.vmem [shape: f32[2,1,32], index: 8, kind: input, shape index: {}]
  %s9 = inlined_call_operand.vmem [shape: f32[2,1,32], index: 9, kind: input, shape index: {}]
  %s10 = inlined_call_operand.vmem [shape: bf16[2,32,128], index: 10, kind: input, shape index: {}]
  %s11 = inlined_call_operand.vmem [shape: f32[2,1,128], index: 11, kind: input, shape index: {}]
  %s12 = inlined_call_operand.vmem [shape: bf16[2,128,32], index: 12, kind: input, shape index: {}]
  %s13 = inlined_call_operand.vmem [shape: f32[2,1,32], index: 13, kind: input, shape index: {}]
  %s14 = inlined_call_operand.vmem [shape: f32[1,32], index: 14, kind: input, shape index: {}]
  %s15 = inlined_call_operand.vmem [shape: f32[1,32], index: 15, kind: input, shape index: {}]
  %s16 = inlined_call_operand.vmem [shape: bf16[32,128], index: 16, kind: input, shape index: {}]
  %s17 = inlined_call_operand.vmem [shape: f32[1,128], index: 17, kind: input, shape index: {}]
  %s18 = inlined_call_operand.vmem [shape: f32[16,128], index: 18, kind: output, shape index: {}]
  %s19 = sld [smem:[#allocation0]]
  $region101: #{little_language_model_forward.1} parent=0
    _
  %s21 = ssub.s32 1, %s19
  %s22 = scalar_select 0, %s21, %s19
  %s24 = sshll.u32 %s0, 4
  %s25 = int_to_ptr.vmem [resolvable:$true] %s24
  %27 = dma.vmem_to_smem %s25, 16, [#allocation3], [#allocation2]
  %29 = dma.done [#allocation2], 16
  %30 = sfence
  loop: start=0, step=1, limit=4
  $region2: #{little_language_model_forward.1} parent=0 // loop_pre_header
    _
  $region3: #{little_language_model_forward.1} parent=0 // loop_header
    %s32 = sphi 0, %s36
    %p33 = scmp.ge.s32.totalorder %s32, 4
    %s40 = sphi 0, %s40
    %s42 = sphi 0, %s40
    %s43 = sphi 0, %s42
    %s57 = sphi 0, %s43
    %s61 = sphi 0, %s61
    %s63 = sphi 0, %s61
    %s64 = sphi 0, %s63
    %s78 = sphi 0, %s64
    %s82 = sphi 0, %s82
    %s84 = sphi 0, %s82
    %s85 = sphi 0, %s84
    %s99 = sphi 0, %s85
    %s103 = sphi 0, %s103
    %s105 = sphi 0, %s103
    %s106 = sphi 0, %s105
    %s120 = sphi 0, %s106
    %s124 = sphi 0, %s124
    %s126 = sphi 0, %s124
    %s127 = sphi 0, %s126
    %s141 = sphi 0, %s127
    %s145 = sphi 0, %s145
    %s147 = sphi 0, %s145
    %s148 = sphi 0, %s147
    %s162 = sphi 0, %s148
    %s166 = sphi 0, %s166
    %s168 = sphi 0, %s166
    %s169 = sphi 0, %s168
    %s183 = sphi 0, %s169
    %s187 = sphi 0, %s187
    %s189 = sphi 0, %s187
    %s190 = sphi 0, %s189
    %s204 = sphi 0, %s190
    %s208 = sphi 0, %s208
    %s210 = sphi 0, %s208
    %s211 = sphi 0, %s210
    %s225 = sphi 0, %s211
    %s229 = sphi 0, %s229
    %s231 = sphi 0, %s229
    %s232 = sphi 0, %s231
    %s246 = sphi 0, %s232
    %s250 = sphi 0, %s250
    %s252 = sphi 0, %s250
    %s253 = sphi 0, %s252
    %s267 = sphi 0, %s253
    %s271 = sphi 0, %s271
    %s273 = sphi 0, %s271
    %s274 = sphi 0, %s273
    %s288 = sphi 0, %s274
    %s292 = sphi 0, %s292
    %s294 = sphi 0, %s292
    %s295 = sphi 0, %s294
    %s309 = sphi 0, %s295
    %s313 = sphi 0, %s313
    %s315 = sphi 0, %s313
    %s316 = sphi 0, %s315
    %s330 = sphi 0, %s316
    %s334 = sphi 0, %s334
    %s336 = sphi 0, %s334
    %s337 = sphi 0, %s336
    %s351 = sphi 0, %s337
    %s355 = sphi 0, %s355
    %s357 = sphi 0, %s355
    %s358 = sphi 0, %s357
    %s372 = sphi 0, %s358
    %s376 = sphi 0, %s376
    %s378 = sphi 0, %s376
    %s379 = sphi 0, %s378
    %s393 = sphi 0, %s379
    %s399 = sphi 0, %s401
    %s402 = sphi 0, %s399
    %s403 = sphi 0, %s402
    %s419 = sphi 0, %s403
  $region4: #{little_language_model_forward.1} parent=0 // loop_header_branch
    %35 = sbr.rel (%p33) target = $region8
  $region5: #{little_language_model_forward.1} parent=0 // loop_body
    %s37 = ssub.s32 %s32, 1
    %s38 = ssub.s32 %s32, 2
    %s39 = sadd.s32 %s32, 1
    %s41 = sadd.s32 %s40, 1
    %p44 = scmp.eq.s32.totalorder %s32, 1
    %p45 = scmp.ne.s32.totalorder %s40, %s42
    %p46 = scmp.eq.s32.totalorder %s32, 0
    %p47 = por %p45, %p46
    %p48 = scmp.ne.s32.totalorder %s40, %s42
    %p49 = scmp.eq.s32.totalorder %s37, 1
    %p50 = por %p48, %p49
    %p51 = scmp.ne.s32.totalorder %s42, %s43
    %p52 = scmp.eq.s32.totalorder %s37, 0
    %p53 = por %p51, %p52
    %p54 = scmp.ne.s32.totalorder %s42, %s43
    %p55 = scmp.eq.s32.totalorder %s38, 1
    %p56 = por %p54, %p55
    %p58 = scmp.ne.s32.totalorder %s43, %s57
    %p59 = scmp.eq.s32.totalorder %s38, 0
    %p60 = por %p58, %p59
    %s62 = sadd.s32 %s61, 1
    %p65 = scmp.eq.s32.totalorder %s32, 1
    %p66 = scmp.ne.s32.totalorder %s61, %s63
    %p67 = scmp.eq.s32.totalorder %s32, 0
    %p68 = por %p66, %p67
    %p69 = scmp.ne.s32.totalorder %s61, %s63
    %p70 = scmp.eq.s32.totalorder %s37, 1
    %p71 = por %p69, %p70
    %p72 = scmp.ne.s32.totalorder %s63, %s64
    %p73 = scmp.eq.s32.totalorder %s37, 0
    %p74 = por %p72, %p73
    %p75 = scmp.ne.s32.totalorder %s63, %s64
    %p76 = scmp.eq.s32.totalorder %s38, 1
    %p77 = por %p75, %p76
    %p79 = scmp.ne.s32.totalorder %s64, %s78
    %p80 = scmp.eq.s32.totalorder %s38, 0
    %p81 = por %p79, %p80
    %s83 = sadd.s32 %s82, 1
    %p86 = scmp.eq.s32.totalorder %s32, 1
    %p87 = scmp.ne.s32.totalorder %s82, %s84
    %p88 = scmp.eq.s32.totalorder %s32, 0
    %p89 = por %p87, %p88
    %p90 = scmp.ne.s32.totalorder %s82, %s84
    %p91 = scmp.eq.s32.totalorder %s37, 1
    %p92 = por %p90, %p91
    %p93 = scmp.ne.s32.totalorder %s84, %s85
    %p94 = scmp.eq.s32.totalorder %s37, 0
    %p95 = por %p93, %p94
    %p96 = scmp.ne.s32.totalorder %s84, %s85
    %p97 = scmp.eq.s32.totalorder %s38, 1
    %p98 = por %p96, %p97
    %p100 = scmp.ne.s32.totalorder %s85, %s99
    %p101 = scmp.eq.s32.totalorder %s38, 0
    %p102 = por %p100, %p101
    %s104 = sadd.s32 %s103, 1
    %p107 = scmp.eq.s32.totalorder %s32, 1
    %p108 = scmp.ne.s32.totalorder %s103, %s105
    %p109 = scmp.eq.s32.totalorder %s32, 0
    %p110 = por %p108, %p109
    %p111 = scmp.ne.s32.totalorder %s103, %s105
    %p112 = scmp.eq.s32.totalorder %s37, 1
    %p113 = por %p111, %p112
    %p114 = scmp.ne.s32.totalorder %s105, %s106
    %p115 = scmp.eq.s32.totalorder %s37, 0
    %p116 = por %p114, %p115
    %p117 = scmp.ne.s32.totalorder %s105, %s106
    %p118 = scmp.eq.s32.totalorder %s38, 1
    %p119 = por %p117, %p118
    %p121 = scmp.ne.s32.totalorder %s106, %s120
    %p122 = scmp.eq.s32.totalorder %s38, 0
    %p123 = por %p121, %p122
    %s125 = sadd.s32 %s124, 1
    %p128 = scmp.eq.s32.totalorder %s32, 1
    %p129 = scmp.ne.s32.totalorder %s124, %s126
    %p130 = scmp.eq.s32.totalorder %s32, 0
    %p131 = por %p129, %p130
    %p132 = scmp.ne.s32.totalorder %s124, %s126
    %p133 = scmp.eq.s32.totalorder %s37, 1
    %p134 = por %p132, %p133
    %p135 = scmp.ne.s32.totalorder %s126, %s127
    %p136 = scmp.eq.s32.totalorder %s37, 0
    %p137 = por %p135, %p136
    %p138 = scmp.ne.s32.totalorder %s126, %s127
    %p139 = scmp.eq.s32.totalorder %s38, 1
    %p140 = por %p138, %p139
    %p142 = scmp.ne.s32.totalorder %s127, %s141
    %p143 = scmp.eq.s32.totalorder %s38, 0
    %p144 = por %p142, %p143
    %s146 = sadd.s32 %s145, 1
    %p149 = scmp.eq.s32.totalorder %s32, 1
    %p150 = scmp.ne.s32.totalorder %s145, %s147
    %p151 = scmp.eq.s32.totalorder %s32, 0
    %p152 = por %p150, %p151
    %p153 = scmp.ne.s32.totalorder %s145, %s147
    %p154 = scmp.eq.s32.totalorder %s37, 1
    %p155 = por %p153, %p154
    %p156 = scmp.ne.s32.totalorder %s147, %s148
    %p157 = scmp.eq.s32.totalorder %s37, 0
    %p158 = por %p156, %p157
    %p159 = scmp.ne.s32.totalorder %s147, %s148
    %p160 = scmp.eq.s32.totalorder %s38, 1
    %p161 = por %p159, %p160
    %p163 = scmp.ne.s32.totalorder %s148, %s162
    %p164 = scmp.eq.s32.totalorder %s38, 0
    %p165 = por %p163, %p164
    %s167 = sadd.s32 %s166, 1
    %p170 = scmp.eq.s32.totalorder %s32, 1
    %p171 = scmp.ne.s32.totalorder %s166, %s168
    %p172 = scmp.eq.s32.totalorder %s32, 0
    %p173 = por %p171, %p172
    %p174 = scmp.ne.s32.totalorder %s166, %s168
    %p175 = scmp.eq.s32.totalorder %s37, 1
    %p176 = por %p174, %p175
    %p177 = scmp.ne.s32.totalorder %s168, %s169
    %p178 = scmp.eq.s32.totalorder %s37, 0
    %p179 = por %p177, %p178
    %p180 = scmp.ne.s32.totalorder %s168, %s169
    %p181 = scmp.eq.s32.totalorder %s38, 1
    %p182 = por %p180, %p181
    %p184 = scmp.ne.s32.totalorder %s169, %s183
    %p185 = scmp.eq.s32.totalorder %s38, 0
    %p186 = por %p184, %p185
    %s188 = sadd.s32 %s187, 1
    %p191 = scmp.eq.s32.totalorder %s32, 1
    %p192 = scmp.ne.s32.totalorder %s187, %s189
    %p193 = scmp.eq.s32.totalorder %s32, 0
    %p194 = por %p192, %p193
    %p195 = scmp.ne.s32.totalorder %s187, %s189
    %p196 = scmp.eq.s32.totalorder %s37, 1
    %p197 = por %p195, %p196
    %p198 = scmp.ne.s32.totalorder %s189, %s190
    %p199 = scmp.eq.s32.totalorder %s37, 0
    %p200 = por %p198, %p199
    %p201 = scmp.ne.s32.totalorder %s189, %s190
    %p202 = scmp.eq.s32.totalorder %s38, 1
    %p203 = por %p201, %p202
    %p205 = scmp.ne.s32.totalorder %s190, %s204
    %p206 = scmp.eq.s32.totalorder %s38, 0
    %p207 = por %p205, %p206
    %s209 = sadd.s32 %s208, 1
    %p212 = scmp.eq.s32.totalorder %s32, 1
    %p213 = scmp.ne.s32.totalorder %s208, %s210
    %p214 = scmp.eq.s32.totalorder %s32, 0
    %p215 = por %p213, %p214
    %p216 = scmp.ne.s32.totalorder %s208, %s210
    %p217 = scmp.eq.s32.totalorder %s37, 1
    %p218 = por %p216, %p217
    %p219 = scmp.ne.s32.totalorder %s210, %s211
    %p220 = scmp.eq.s32.totalorder %s37, 0
    %p221 = por %p219, %p220
    %p222 = scmp.ne.s32.totalorder %s210, %s211
    %p223 = scmp.eq.s32.totalorder %s38, 1
    %p224 = por %p222, %p223
    %p226 = scmp.ne.s32.totalorder %s211, %s225
    %p227 = scmp.eq.s32.totalorder %s38, 0
    %p228 = por %p226, %p227
    %s230 = sadd.s32 %s229, 1
    %p233 = scmp.eq.s32.totalorder %s32, 1
    %p234 = scmp.ne.s32.totalorder %s229, %s231
    %p235 = scmp.eq.s32.totalorder %s32, 0
    %p236 = por %p234, %p235
    %p237 = scmp.ne.s32.totalorder %s229, %s231
    %p238 = scmp.eq.s32.totalorder %s37, 1
    %p239 = por %p237, %p238
    %p240 = scmp.ne.s32.totalorder %s231, %s232
    %p241 = scmp.eq.s32.totalorder %s37, 0
    %p242 = por %p240, %p241
    %p243 = scmp.ne.s32.totalorder %s231, %s232
    %p244 = scmp.eq.s32.totalorder %s38, 1
    %p245 = por %p243, %p244
    %p247 = scmp.ne.s32.totalorder %s232, %s246
    %p248 = scmp.eq.s32.totalorder %s38, 0
    %p249 = por %p247, %p248
    %s251 = sadd.s32 %s250, 1
    %p254 = scmp.eq.s32.totalorder %s32, 1
    %p255 = scmp.ne.s32.totalorder %s250, %s252
    %p256 = scmp.eq.s32.totalorder %s32, 0
    %p257 = por %p255, %p256
    %p258 = scmp.ne.s32.totalorder %s250, %s252
    %p259 = scmp.eq.s32.totalorder %s37, 1
    %p260 = por %p258, %p259
    %p261 = scmp.ne.s32.totalorder %s252, %s253
    %p262 = scmp.eq.s32.totalorder %s37, 0
    %p263 = por %p261, %p262
    %p264 = scmp.ne.s32.totalorder %s252, %s253
    %p265 = scmp.eq.s32.totalorder %s38, 1
    %p266 = por %p264, %p265
    %p268 = scmp.ne.s32.totalorder %s253, %s267
    %p269 = scmp.eq.s32.totalorder %s38, 0
    %p270 = por %p268, %p269
    %s272 = sadd.s32 %s271, 1
    %p275 = scmp.eq.s32.totalorder %s32, 1
    %p276 = scmp.ne.s32.totalorder %s271, %s273
    %p277 = scmp.eq.s32.totalorder %s32, 0
    %p278 = por %p276, %p277
    %p279 = scmp.ne.s32.totalorder %s271, %s273
    %p280 = scmp.eq.s32.totalorder %s37, 1
    %p281 = por %p279, %p280
    %p282 = scmp.ne.s32.totalorder %s273, %s274
    %p283 = scmp.eq.s32.totalorder %s37, 0
    %p284 = por %p282, %p283
    %p285 = scmp.ne.s32.totalorder %s273, %s274
    %p286 = scmp.eq.s32.totalorder %s38, 1
    %p287 = por %p285, %p286
    %p289 = scmp.ne.s32.totalorder %s274, %s288
    %p290 = scmp.eq.s32.totalorder %s38, 0
    %p291 = por %p289, %p290
    %s293 = sadd.s32 %s292, 1
    %p296 = scmp.eq.s32.totalorder %s32, 1
    %p297 = scmp.ne.s32.totalorder %s292, %s294
    %p298 = scmp.eq.s32.totalorder %s32, 0
    %p299 = por %p297, %p298
    %p300 = scmp.ne.s32.totalorder %s292, %s294
    %p301 = scmp.eq.s32.totalorder %s37, 1
    %p302 = por %p300, %p301
    %p303 = scmp.ne.s32.totalorder %s294, %s295
    %p304 = scmp.eq.s32.totalorder %s37, 0
    %p305 = por %p303, %p304
    %p306 = scmp.ne.s32.totalorder %s294, %s295
    %p307 = scmp.eq.s32.totalorder %s38, 1
    %p308 = por %p306, %p307
    %p310 = scmp.ne.s32.totalorder %s295, %s309
    %p311 = scmp.eq.s32.totalorder %s38, 0
    %p312 = por %p310, %p311
    %s314 = sadd.s32 %s313, 1
    %p317 = scmp.eq.s32.totalorder %s32, 1
    %p318 = scmp.ne.s32.totalorder %s313, %s315
    %p319 = scmp.eq.s32.totalorder %s32, 0
    %p320 = por %p318, %p319
    %p321 = scmp.ne.s32.totalorder %s313, %s315
    %p322 = scmp.eq.s32.totalorder %s37, 1
    %p323 = por %p321, %p322
    %p324 = scmp.ne.s32.totalorder %s315, %s316
    %p325 = scmp.eq.s32.totalorder %s37, 0
    %p326 = por %p324, %p325
    %p327 = scmp.ne.s32.totalorder %s315, %s316
    %p328 = scmp.eq.s32.totalorder %s38, 1
    %p329 = por %p327, %p328
    %p331 = scmp.ne.s32.totalorder %s316, %s330
    %p332 = scmp.eq.s32.totalorder %s38, 0
    %p333 = por %p331, %p332
    %s335 = sadd.s32 %s334, 1
    %p338 = scmp.eq.s32.totalorder %s32, 1
    %p339 = scmp.ne.s32.totalorder %s334, %s336
    %p340 = scmp.eq.s32.totalorder %s32, 0
    %p341 = por %p339, %p340
    %p342 = scmp.ne.s32.totalorder %s334, %s336
    %p343 = scmp.eq.s32.totalorder %s37, 1
    %p344 = por %p342, %p343
    %p345 = scmp.ne.s32.totalorder %s336, %s337
    %p346 = scmp.eq.s32.totalorder %s37, 0
    %p347 = por %p345, %p346
    %p348 = scmp.ne.s32.totalorder %s336, %s337
    %p349 = scmp.eq.s32.totalorder %s38, 1
    %p350 = por %p348, %p349
    %p352 = scmp.ne.s32.totalorder %s337, %s351
    %p353 = scmp.eq.s32.totalorder %s38, 0
    %p354 = por %p352, %p353
    %s356 = sadd.s32 %s355, 1
    %p359 = scmp.eq.s32.totalorder %s32, 1
    %p360 = scmp.ne.s32.totalorder %s355, %s357
    %p361 = scmp.eq.s32.totalorder %s32, 0
    %p362 = por %p360, %p361
    %p363 = scmp.ne.s32.totalorder %s355, %s357
    %p364 = scmp.eq.s32.totalorder %s37, 1
    %p365 = por %p363, %p364
    %p366 = scmp.ne.s32.totalorder %s357, %s358
    %p367 = scmp.eq.s32.totalorder %s37, 0
    %p368 = por %p366, %p367
    %p369 = scmp.ne.s32.totalorder %s357, %s358
    %p370 = scmp.eq.s32.totalorder %s38, 1
    %p371 = por %p369, %p370
    %p373 = scmp.ne.s32.totalorder %s358, %s372
    %p374 = scmp.eq.s32.totalorder %s38, 0
    %p375 = por %p373, %p374
    %s377 = sadd.s32 %s376, 1
    %p380 = scmp.eq.s32.totalorder %s32, 1
    %p381 = scmp.ne.s32.totalorder %s376, %s378
    %p382 = scmp.eq.s32.totalorder %s32, 0
    %p383 = por %p381, %p382
    %p384 = scmp.ne.s32.totalorder %s376, %s378
    %p385 = scmp.eq.s32.totalorder %s37, 1
    %p386 = por %p384, %p385
    %p387 = scmp.ne.s32.totalorder %s378, %s379
    %p388 = scmp.eq.s32.totalorder %s37, 0
    %p389 = por %p387, %p388
    %p390 = scmp.ne.s32.totalorder %s378, %s379
    %p391 = scmp.eq.s32.totalorder %s38, 1
    %p392 = por %p390, %p391
    %p394 = scmp.ne.s32.totalorder %s379, %s393
    %p395 = scmp.eq.s32.totalorder %s38, 0
    %p396 = por %p394, %p395
    %s397 = ssub.s32 %s32, %s39
    %p398 = scmp.eq.s32.totalorder %s397, 0
    %s400 = sadd.s32 %s399, 1
    %s401 = scalar_select %p398, %s399, %s400
    %p404 = pneg %p398
    %p405 = scmp.eq.s32.totalorder %s32, 1
    %p406 = por %p404, %p405
    %p407 = scmp.ne.s32.totalorder %s399, %s402
    %p408 = scmp.eq.s32.totalorder %s32, 0
    %p409 = por %p407, %p408
    %p410 = scmp.ne.s32.totalorder %s399, %s402
    %p411 = scmp.eq.s32.totalorder %s37, 1
    %p412 = por %p410, %p411
    %p413 = scmp.ne.s32.totalorder %s402, %s403
    %p414 = scmp.eq.s32.totalorder %s37, 0
    %p415 = por %p413, %p414
    %p416 = scmp.ne.s32.totalorder %s402, %s403
    %p417 = scmp.eq.s32.totalorder %s38, 1
    %p418 = por %p416, %p417
    %p420 = scmp.ne.s32.totalorder %s403, %s419
    %p421 = scmp.eq.s32.totalorder %s38, 0
    %p422 = por %p420, %p421
    %p423 = scmp.le.s32.totalorder 1, %s32
    %p424 = scmp.lt.s32.totalorder %s32, 3
    %p425 = pnand %p423, %p424
    %p426 = pneg %p425
    // Predicated region
    $region9: #{little_language_model_forward.1} parent=5 // pred_check
      _
    $region10: #{little_language_model_forward.1} parent=5 // pred_check_branch
      %428 = sbr.rel (%p425) target = $region12
    $region11: #{little_language_model_forward.1} parent=5 // pred_region
      %s429 = ssub.s32 %s32, 1
      // Predicated region
      $region13: #{little_language_model_forward.1} parent=11 // pred_check
        %p430 = pneg %p53
      $region14: #{little_language_model_forward.1} parent=11 // pred_check_branch
        %432 = sbr.rel (%p430) target = $region16
      $region15: #{little_language_model_forward.1} parent=11 // pred_region
        _
      $region16: #{little_language_model_forward.1} parent=11 // pred_fallthru
        _
      // Predicated region
      $region17: #{little_language_model_forward.1} parent=11 // pred_check
        %p433 = pneg %p74
      $region18: #{little_language_model_forward.1} parent=11 // pred_check_branch
        %435 = sbr.rel (%p433) target = $region20
      $region19: #{little_language_model_forward.1} parent=11 // pred_region
        _
      $region20: #{little_language_model_forward.1} parent=11 // pred_fallthru
        _
      // Predicated region
      $region21: #{little_language_model_forward.1} parent=11 // pred_check
        %p436 = pneg %p95
      $region22: #{little_language_model_forward.1} parent=11 // pred_check_branch
        %438 = sbr.rel (%p436) target = $region24
      $region23: #{little_language_model_forward.1} parent=11 // pred_region
        _
      $region24: #{little_language_model_forward.1} parent=11 // pred_fallthru
        _
      // Predicated region
      $region25: #{little_language_model_forward.1} parent=11 // pred_check
        %p439 = pneg %p116
      $region26: #{little_language_model_forward.1} parent=11 // pred_check_branch
        %441 = sbr.rel (%p439) target = $region28
      $region27: #{little_language_model_forward.1} parent=11 // pred_region
        _
      $region28: #{little_language_model_forward.1} parent=11 // pred_fallthru
        _
      // Predicated region
      $region29: #{little_language_model_forward.1} parent=11 // pred_check
        %p442 = pneg %p137
      $region30: #{little_language_model_forward.1} parent=11 // pred_check_branch
        %444 = sbr.rel (%p442) target = $region32
      $region31: #{little_language_model_forward.1} parent=11 // pred_region
        _
      $region32: #{little_language_model_forward.1} parent=11 // pred_fallthru
        _
      // Predicated region
      $region33: #{little_language_model_forward.1} parent=11 // pred_check
        %p445 = pneg %p158
      $region34: #{little_language_model_forward.1} parent=11 // pred_check_branch
        %447 = sbr.rel (%p445) target = $region36
      $region35: #{little_language_model_forward.1} parent=11 // pred_region
        _
      $region36: #{little_language_model_forward.1} parent=11 // pred_fallthru
        _
      // Predicated region
      $region37: #{little_language_model_forward.1} parent=11 // pred_check
        %p448 = pneg %p179
      $region38: #{little_language_model_forward.1} parent=11 // pred_check_branch
        %450 = sbr.rel (%p448) target = $region40
      $region39: #{little_language_model_forward.1} parent=11 // pred_region
        _
      $region40: #{little_language_model_forward.1} parent=11 // pred_fallthru
        _
      // Predicated region
      $region41: #{little_language_model_forward.1} parent=11 // pred_check
        %p451 = pneg %p200
      $region42: #{little_language_model_forward.1} parent=11 // pred_check_branch
        %453 = sbr.rel (%p451) target = $region44
      $region43: #{little_language_model_forward.1} parent=11 // pred_region
        _
      $region44: #{little_language_model_forward.1} parent=11 // pred_fallthru
        _
      // Predicated region
      $region45: #{little_language_model_forward.1} parent=11 // pred_check
        %p454 = pneg %p221
      $region46: #{little_language_model_forward.1} parent=11 // pred_check_branch
        %456 = sbr.rel (%p454) target = $region48
      $region47: #{little_language_model_forward.1} parent=11 // pred_region
        _
      $region48: #{little_language_model_forward.1} parent=11 // pred_fallthru
        _
      // Predicated region
      $region49: #{little_language_model_forward.1} parent=11 // pred_check
        %p457 = pneg %p242
      $region50: #{little_language_model_forward.1} parent=11 // pred_check_branch
        %459 = sbr.rel (%p457) target = $region52
      $region51: #{little_language_model_forward.1} parent=11 // pred_region
        _
      $region52: #{little_language_model_forward.1} parent=11 // pred_fallthru
        _
      // Predicated region
      $region53: #{little_language_model_forward.1} parent=11 // pred_check
        %p460 = pneg %p263
      $region54: #{little_language_model_forward.1} parent=11 // pred_check_branch
        %462 = sbr.rel (%p460) target = $region56
      $region55: #{little_language_model_forward.1} parent=11 // pred_region
        _
      $region56: #{little_language_model_forward.1} parent=11 // pred_fallthru
        _
      // Predicated region
      $region57: #{little_language_model_forward.1} parent=11 // pred_check
        %p463 = pneg %p284
      $region58: #{little_language_model_forward.1} parent=11 // pred_check_branch
        %465 = sbr.rel (%p463) target = $region60
      $region59: #{little_language_model_forward.1} parent=11 // pred_region
        _
      $region60: #{little_language_model_forward.1} parent=11 // pred_fallthru
        _
      // Predicated region
      $region61: #{little_language_model_forward.1} parent=11 // pred_check
        %p466 = pneg %p305
      $region62: #{little_language_model_forward.1} parent=11 // pred_check_branch
        %468 = sbr.rel (%p466) target = $region64
      $region63: #{little_language_model_forward.1} parent=11 // pred_region
        _
      $region64: #{little_language_model_forward.1} parent=11 // pred_fallthru
        _
      // Predicated region
      $region65: #{little_language_model_forward.1} parent=11 // pred_check
        %p469 = pneg %p326
      $region66: #{little_language_model_forward.1} parent=11 // pred_check_branch
        %471 = sbr.rel (%p469) target = $region68
      $region67: #{little_language_model_forward.1} parent=11 // pred_region
        _
      $region68: #{little_language_model_forward.1} parent=11 // pred_fallthru
        _
      // Predicated region
      $region69: #{little_language_model_forward.1} parent=11 // pred_check
        %p472 = pneg %p347
      $region70: #{little_language_model_forward.1} parent=11 // pred_check_branch
        %474 = sbr.rel (%p472) target = $region72
      $region71: #{little_language_model_forward.1} parent=11 // pred_region
        _
      $region72: #{little_language_model_forward.1} parent=11 // pred_fallthru
        _
      // Predicated region
      $region73: #{little_language_model_forward.1} parent=11 // pred_check
        %p475 = pneg %p368
      $region74: #{little_language_model_forward.1} parent=11 // pred_check_branch
        %477 = sbr.rel (%p475) target = $region76
      $region75: #{little_language_model_forward.1} parent=11 // pred_region
        _
      $region76: #{little_language_model_forward.1} parent=11 // pred_fallthru
        _
      // Predicated region
      $region77: #{little_language_model_forward.1} parent=11 // pred_check
        %p478 = pneg %p389
      $region78: #{little_language_model_forward.1} parent=11 // pred_check_branch
        %480 = sbr.rel (%p478) target = $region80
      $region79: #{little_language_model_forward.1} parent=11 // pred_region
        _
      $region80: #{little_language_model_forward.1} parent=11 // pred_fallthru
        _
    $region12: #{little_language_model_forward.1} parent=5 // pred_fallthru
      _
    %p481 = scmp.lt.s32.totalorder %s32, 2
    // Predicated region
    $region81: #{little_language_model_forward.1} parent=5 // pred_check
      %p482 = pneg %p481
    $region82: #{little_language_model_forward.1} parent=5 // pred_check_branch
      %484 = sbr.rel (%p482) target = $region84
    $region83: #{little_language_model_forward.1} parent=5 // pred_region
      _
    $region84: #{little_language_model_forward.1} parent=5 // pred_fallthru
      _
    %p485 = scmp.le.s32.totalorder 1, %s32
    %p486 = scmp.lt.s32.totalorder %s32, 3
    %p487 = pnand %p485, %p486
    %p488 = pneg %p487
    // Predicated region
    $region85: #{little_language_model_forward.1} parent=5 // pred_check
      _
    $region86: #{little_language_model_forward.1} parent=5 // pred_check_branch
      %490 = sbr.rel (%p487) target = $region88
    $region87: #{little_language_model_forward.1} parent=5 // pred_region
      %s491 = ssub.s32 %s32, 1
      %p492 = pneg %p53
      %p493 = pneg %p50
      %p494 = pneg %p74
      %p495 = pneg %p71
      %p496 = pneg %p95
      %p497 = pneg %p92
      %p498 = pneg %p116
      %p499 = pneg %p113
      %p500 = pneg %p137
      %p501 = pneg %p134
      %p502 = pneg %p158
      %p503 = pneg %p155
      %p504 = pneg %p179
      %p505 = pneg %p176
      %p506 = pneg %p200
      %p507 = pneg %p197
      %p508 = pneg %p221
      %p509 = pneg %p218
      %p510 = pneg %p242
      %p511 = pneg %p239
      %p512 = pneg %p263
      %p513 = pneg %p260
      %p514 = pneg %p284
      %p515 = pneg %p281
      %p516 = pneg %p305
      %p517 = pneg %p302
      %p518 = pneg %p326
      %p519 = pneg %p323
      %p520 = pneg %p347
      %p521 = pneg %p344
      %p522 = pneg %p368
      %p523 = pneg %p365
      %p524 = pneg %p389
      %p525 = pneg %p386
      %p526 = pneg %p415
      %p527 = pneg %p412
      %p528 = scmp.lt.s32.totalorder %s37, 1
      %s529 = scalar_select %p528, %s37, 1
      %s530 = smul.addr %s529, 8
      %s531 = scalar_lea.vmem %s18, %s530
      %p532 = scmp.lt.s32.totalorder %s37, 1
      %s533 = scalar_select %p532, %s37, 1
      %s534 = smul.addr %s533, 8
      %s535 = scalar_lea.vmem %s18, %s534
      %s537 = smul.u32 %s37, 8
      %s538 = sld [smem:[#allocation3 + %s537]]
      %s539 = scalar_lea.vmem %s1, %s538
      %v540 = vld [vmem:[%s539] sm:$0x1]
      %s541 = sadd.s32 %s537, 1
      %s542 = sld [smem:[#allocation3 + %s541]]
      %s543 = scalar_lea.vmem %s1, %s542
      %v544 = vld [vmem:[%s543] sm:$0x1]
      %s545 = sadd.s32 %s537, 2
      %s546 = sld [smem:[#allocation3 + %s545]]
      %s547 = scalar_lea.vmem %s1, %s546
      %v548 = vld [vmem:[%s547] sm:$0x1]
      %s549 = sadd.s32 %s537, 3
      %s550 = sld [smem:[#allocation3 + %s549]]
      %s551 = scalar_lea.vmem %s1, %s550
      %v552 = vld [vmem:[%s551] sm:$0x1]
      %s553 = sadd.s32 %s537, 4
      %s554 = sld [smem:[#allocation3 + %s553]]
      %s555 = scalar_lea.vmem %s1, %s554
      %v556 = vld [vmem:[%s555] sm:$0x1]
      %s557 = sadd.s32 %s537, 5
      %s558 = sld [smem:[#allocation3 + %s557]]
      %s559 = scalar_lea.vmem %s1, %s558
      %v560 = vld [vmem:[%s559] sm:$0x1]
      %s561 = sadd.s32 %s537, 6
      %s562 = sld [smem:[#allocation3 + %s561]]
      %s563 = scalar_lea.vmem %s1, %s562
      %v564 = vld [vmem:[%s563] sm:$0x1]
      %s565 = sadd.s32 %s537, 7
      %s566 = sld [smem:[#allocation3 + %s565]]
      %s567 = scalar_lea.vmem %s1, %s566
      %v568 = vld [vmem:[%s567] sm:$0x1]
      %v570 = vperm.slane %v544, 0
      %v573 = vperm.slane %v548, 0
      %v576 = vperm.slane %v552, 0
      %v579 = vperm.slane %v556, 0
      %v582 = vperm.slane %v560, 0
      %v585 = vperm.slane %v564, 0
      %v588 = vperm.slane %v568, 0
      %vm590 = vcmask 1040384
      %v591 = vsel %vm590, %v540, %v570
      %vm592 = vcmask 1041408
      %v593 = vsel %vm592, %v591, %v573
      %vm594 = vcmask 1042432
      %v595 = vsel %vm594, %v593, %v576
      %vm596 = vcmask 1043456
      %v597 = vsel %vm596, %v595, %v579
      %vm598 = vcmask 1044480
      %v599 = vsel %vm598, %v597, %v582
      %vm600 = vcmask 1045504
      %v601 = vsel %vm600, %v599, %v585
      %vm602 = vcmask 1046528
      %v603 = vsel %vm602, %v601, %v588
      %v604 = vld [vmem:[%s2] sm:$0xff]
      %v605 = vadd.f32 %v603, %v604
      %v606 = vlaneseq
      %v607 = vshrl.u32 %v606, 7
      %v608 = vlaneseq
      %v609 = vand.u32 %v608, 127
      %vm610 = vcmp.ge.s32.totalorder %v607, %v609
      %v611 = vsel %vm610, 0.0, -1e+30
      %v612 = vld [vmem:[%s3] sm:$0x1]
      %v613 = vld [vmem:[%s4] sm:$0x1]
      %vm614 = vcmask 261120
      %v615 = vsel %vm614, %v605, 0.0
      %616 = vadd.xlane.f32.xlu0 %v615
      %v617 = vpop.xlane.xlu0 %616
      %v618 = vrcp.pop 32.0
      %v619 = vmul.f32 32.0, %v618
      %v620 = vsub.f32 1.0, %v619
      %v621 = vmul.f32 %v618, %v620
      %v622 = vadd.f32 %v618, %v621
      %vm623 = vweird.f32 %v618
      %v624 = vsel %vm623, %v618, %v622
      %v625 = vmul.f32 %v617, %v624
      %v626 = vsub.f32 %v605, %v625
      %v627 = vmul.f32 %v626, %v626
      %v628 = vsel %vm614, %v627, 0.0
      %629 = vadd.xlane.f32.xlu0 %v628
      %v630 = vpop.xlane.xlu0 %629
      %v631 = vmul.f32 %v630, %v624
      %v632 = vadd.f32 %v631, 1e-05
      %v633 = vrsqrt.pop %v632
      %v634 = vmul.f32 %v633, %v632
      %v635 = vmul.f32 %v634, %v633
      %v636 = vmul.f32 0.5, %v635
      %v637 = vsub.f32 1.5, %v636
      %v638 = vmul.f32 %v633, %v637
      %vm639 = vweird.f32 %v632
      %vm640 = vweird.f32 %v633
      %vm641 = vmor %vm639, %vm640
      %v642 = vsel %vm641, %v633, %v638
      %v643 = vmul.f32 %v626, %v642
      %v645 = vperm.slane %v612, 0
      %v647 = vmul.f32 %v643, %v645
      %v649 = vperm.slane %v613, 0
      %v651 = vadd.f32 %v647, %v649
      %v652 = vpack.c.bf16 %v651, %v651
      %v653 = vld [vmem:[%s5] sm:$0xf]
      %v654 = vld [vmem:[%s5 + $0x4] sm:$0xf]
      %v655 = vld [vmem:[%s5 + $0x8] sm:$0xf]
      %v656 = vld [vmem:[%s5 + $0xc] sm:$0xf]
      %v661 = vunpack.c.l.b16 %v653
      %v662 = vunpack.c.l.b16 %v654
      %v663 = vunpack.c.l.b16 %v655
      %v664 = vunpack.c.l.b16 %v656
      %v665 = vpack.c.b16 %v662, %v661
      %v666 = vpack.c.b16 %v664, %v663
      %v670 = vsel %vm614, %v652, 0
      %672 = vmatpush.bf16.msra.mxu0 0
      %673 = vmatpush.bf16.msra.mxu0 0
      %674 = vmatpush.bf16.msra.mxu0 0
      %675 = vmatpush.bf16.msra.mxu0 0
      %676 = vmatpush.bf16.msra.mxu0 0
      %677 = vmatpush.bf16.msra.mxu0 0
      %678 = vmatpush.bf16.msra.mxu0 %v666
      %679 = vmatpush.bf16.msra.mxu0 %v665
      %680 = vmatmul.bf16.gmra.mxu0 %v670
      %v681 = vpop.f32.mrf.mxu0
      %v682 = vadd.f32 0.0, %v681
      %v683 = vpop.f32.mrf.mxu0
      %684 = vdwg.mxu0
      %686 = vrot.lane.b32.xlu0 %v682, 120
      %v687 = vpop.permute.xlu0 %686
      %689 = vrot.lane.b32.xlu0 %v682, 112
      %v690 = vpop.permute.xlu0 %689
      %692 = vrot.lane.b32.xlu0 %v682, 104
      %v693 = vpop.permute.xlu0 %692
      %v695 = vpack.c.bf16 %v682, %v682
      %v696 = vpack.c.bf16 %v687, %v687
      %v697 = vpack.c.bf16 %v690, %v690
      %v698 = vpack.c.bf16 %v693, %v693
      %v700 = vunpack.c.l.b16 %v695
      %v701 = vpack.c.b16 %v700, %v700
      %702 = vrot.lane.b32.xlu0 %v701, 96
      %v703 = vpop.permute.xlu0 %702
      %vm704 = vcmask 64512
      %v706 = vsel %vm704, %v695, 0
      %v709 = vsel %vm704, %v703, 0
      %711 = vmatpush.bf16.xpose.msra.mxu0 0
      %712 = vmatpush.bf16.xpose.msra.mxu0 0
      %713 = vmatpush.bf16.xpose.msra.mxu0 0
      %714 = vmatpush.bf16.xpose.msra.mxu0 0
      %715 = vmatpush.bf16.xpose.msra.mxu0 0
      %716 = vmatpush.bf16.xpose.msra.mxu0 0
      %717 = vmatpush.bf16.xpose.msra.mxu0 0
      %718 = vmatpush.bf16.xpose.msra.mxu0 %v709
      %719 = vmatmul.bf16.gmra.mxu0 %v706
      %v720 = vpop.f32.mrf.mxu0
      %v721 = vadd.f32 0.0, %v720
      %v722 = vpop.f32.mrf.mxu0
      %723 = vdwg.mxu0
      %v725 = vunpack.c.l.b16 %v696
      %v726 = vpack.c.b16 %v725, %v725
      %727 = vrot.lane.b32.xlu0 %v726, 96
      %v728 = vpop.permute.xlu0 %727
      %v730 = vsel %vm704, %v696, 0
      %v733 = vsel %vm704, %v728, 0
      %735 = vmatpush.bf16.xpose.msra.mxu0 0
      %736 = vmatpush.bf16.xpose.msra.mxu0 0
      %737 = vmatpush.bf16.xpose.msra.mxu0 0
      %738 = vmatpush.bf16.xpose.msra.mxu0 0
      %739 = vmatpush.bf16.xpose.msra.mxu0 0
      %740 = vmatpush.bf16.xpose.msra.mxu0 0
      %741 = vmatpush.bf16.xpose.msra.mxu0 0
      %742 = vmatpush.bf16.xpose.msra.mxu0 %v733
      %743 = vmatmul.bf16.gmra.mxu0 %v730
      %v744 = vpop.f32.mrf.mxu0
      %v745 = vadd.f32 0.0, %v744
      %v746 = vpop.f32.mrf.mxu0
      %747 = vdwg.mxu0
      %v749 = vunpack.c.l.b16 %v697
      %v750 = vpack.c.b16 %v749, %v749
      %751 = vrot.lane.b32.xlu0 %v750, 96
      %v752 = vpop.permute.xlu0 %751
      %v754 = vsel %vm704, %v697, 0
      %v757 = vsel %vm704, %v752, 0
      %759 = vmatpush.bf16.xpose.msra.mxu0 0
      %760 = vmatpush.bf16.xpose.msra.mxu0 0
      %761 = vmatpush.bf16.xpose.msra.mxu0 0
      %762 = vmatpush.bf16.xpose.msra.mxu0 0
      %763 = vmatpush.bf16.xpose.msra.mxu0 0
      %764 = vmatpush.bf16.xpose.msra.mxu0 0
      %765 = vmatpush.bf16.xpose.msra.mxu0 0
      %766 = vmatpush.bf16.xpose.msra.mxu0 %v757
      %767 = vmatmul.bf16.gmra.mxu0 %v754
      %v768 = vpop.f32.mrf.mxu0
      %v769 = vadd.f32 0.0, %v768
      %v770 = vpop.f32.mrf.mxu0
      %771 = vdwg.mxu0
      %v773 = vunpack.c.l.b16 %v698
      %v774 = vpack.c.b16 %v773, %v773
      %775 = vrot.lane.b32.xlu0 %v774, 96
      %v776 = vpop.permute.xlu0 %775
      %v778 = vsel %vm704, %v698, 0
      %v781 = vsel %vm704, %v776, 0
      %783 = vmatpush.bf16.xpose.msra.mxu0 0
      %784 = vmatpush.bf16.xpose.msra.mxu0 0
      %785 = vmatpush.bf16.xpose.msra.mxu0 0
      %786 = vmatpush.bf16.xpose.msra.mxu0 0
      %787 = vmatpush.bf16.xpose.msra.mxu0 0
      %788 = vmatpush.bf16.xpose.msra.mxu0 0
      %789 = vmatpush.bf16.xpose.msra.mxu0 0
      %790 = vmatpush.bf16.xpose.msra.mxu0 %v781
      %791 = vmatmul.bf16.gmra.mxu0 %v778
      %v792 = vpop.f32.mrf.mxu0
      %v793 = vadd.f32 0.0, %v792
      %v794 = vpop.f32.mrf.mxu0
      %795 = vdwg.mxu0
      %v796 = vmul.f32 %v721, 0.35355338
      %v797 = vmul.f32 %v745, 0.35355338
      %v798 = vmul.f32 %v769, 0.35355338
      %v799 = vmul.f32 %v793, 0.35355338
      %v800 = vadd.f32 %v796, %v611
      %v801 = vadd.f32 %v797, %v611
      %v802 = vadd.f32 %v798, %v611
      %v803 = vadd.f32 %v799, %v611
      %v804 = vsel %vm704, %v800, -inf
      %805 = vmax.xlane.f32.xlu0 %v804
      %v806 = vpop.xlane.xlu0 %805
      %v807 = vsel %vm704, %v801, -inf
      %808 = vmax.xlane.f32.xlu0 %v807
      %v809 = vpop.xlane.xlu0 %808
      %v810 = vsel %vm704, %v802, -inf
      %811 = vmax.xlane.f32.xlu0 %v810
      %v812 = vpop.xlane.xlu0 %811
      %v813 = vsel %vm704, %v803, -inf
      %814 = vmax.xlane.f32.xlu0 %v813
      %v815 = vpop.xlane.xlu0 %814
      %v816 = vsub.f32 %v800, %v806
      %v817 = vsub.f32 %v801, %v809
      %v818 = vsub.f32 %v802, %v812
      %v819 = vsub.f32 %v803, %v815
      %v820 = vmul.f32 %v816, 1.442695
      %v821 = vpow.pop %v820
      %v822 = vmul.f32 %v817, 1.442695
      %v823 = vpow.pop %v822
      %v824 = vmul.f32 %v818, 1.442695
      %v825 = vpow.pop %v824
      %v826 = vmul.f32 %v819, 1.442695
      %v827 = vpow.pop %v826
      %v828 = vsel %vm704, %v821, 0.0
      %829 = vadd.xlane.f32.xlu0 %v828
      %v830 = vpop.xlane.xlu0 %829
      %v831 = vsel %vm704, %v823, 0.0
      %832 = vadd.xlane.f32.xlu0 %v831
      %v833 = vpop.xlane.xlu0 %832
      %v834 = vsel %vm704, %v825, 0.0
      %835 = vadd.xlane.f32.xlu0 %v834
      %v836 = vpop.xlane.xlu0 %835
      %v837 = vsel %vm704, %v827, 0.0
      %838 = vadd.xlane.f32.xlu0 %v837
      %v839 = vpop.xlane.xlu0 %838
      %v840 = vrcp.pop %v830
      %v841 = vrcp.pop %v833
      %v842 = vrcp.pop %v836
      %v843 = vrcp.pop %v839
      %v844 = vmul.f32 %v821, %v840
      %v845 = vmul.f32 %v823, %v841
      %v846 = vmul.f32 %v825, %v842
      %v847 = vmul.f32 %v827, %v843
      %v848 = vpack.c.bf16 %v844, %v844
      %v849 = vpack.c.bf16 %v845, %v845
      %v850 = vpack.c.bf16 %v846, %v846
      %v851 = vpack.c.bf16 %v847, %v847
      %852 = vrot.lane.b32.xlu0 %v701, 64
      %v853 = vpop.permute.xlu0 %852
      %v855 = vsel %vm704, %v848, 0
      %v858 = vsel %vm596, %v853, 0
      %860 = vmatpush.bf16.msra.mxu0 0
      %861 = vmatpush.bf16.msra.mxu0 0
      %862 = vmatpush.bf16.msra.mxu0 0
      %863 = vmatpush.bf16.msra.mxu0 0
      %864 = vmatpush.bf16.msra.mxu0 0
      %865 = vmatpush.bf16.msra.mxu0 0
      %866 = vmatpush.bf16.msra.mxu0 0
      %867 = vmatpush.bf16.msra.mxu0 %v858
      %868 = vmatmul.bf16.gmra.mxu0 %v855
      %v869 = vpop.f32.mrf.mxu0
      %v870 = vadd.f32 0.0, %v869
      %v871 = vpop.f32.mrf.mxu0
      %872 = vdwg.mxu0
      %873 = vrot.lane.b32.xlu0 %v726, 64
      %v874 = vpop.permute.xlu0 %873
      %v876 = vsel %vm704, %v849, 0
      %v879 = vsel %vm596, %v874, 0
      %881 = vmatpush.bf16.msra.mxu0 0
      %882 = vmatpush.bf16.msra.mxu0 0
      %883 = vmatpush.bf16.msra.mxu0 0
      %884 = vmatpush.bf16.msra.mxu0 0
      %885 = vmatpush.bf16.msra.mxu0 0
      %886 = vmatpush.bf16.msra.mxu0 0
      %887 = vmatpush.bf16.msra.mxu0 0
      %888 = vmatpush.bf16.msra.mxu0 %v879
      %889 = vmatmul.bf16.gmra.mxu0 %v876
      %v890 = vpop.f32.mrf.mxu0
      %v891 = vadd.f32 0.0, %v890
      %v892 = vpop.f32.mrf.mxu0
      %893 = vdwg.mxu0
      %894 = vrot.lane.b32.xlu0 %v750, 64
      %v895 = vpop.permute.xlu0 %894
      %v897 = vsel %vm704, %v850, 0
      %v900 = vsel %vm596, %v895, 0
      %902 = vmatpush.bf16.msra.mxu0 0
      %903 = vmatpush.bf16.msra.mxu0 0
      %904 = vmatpush.bf16.msra.mxu0 0
      %905 = vmatpush.bf16.msra.mxu0 0
      %906 = vmatpush.bf16.msra.mxu0 0
      %907 = vmatpush.bf16.msra.mxu0 0
      %908 = vmatpush.bf16.msra.mxu0 0
      %909 = vmatpush.bf16.msra.mxu0 %v900
      %910 = vmatmul.bf16.gmra.mxu0 %v897
      %v911 = vpop.f32.mrf.mxu0
      %v912 = vadd.f32 0.0, %v911
      %v913 = vpop.f32.mrf.mxu0
      %914 = vdwg.mxu0
      %915 = vrot.lane.b32.xlu0 %v774, 64
      %v916 = vpop.permute.xlu0 %915
      %v918 = vsel %vm704, %v851, 0
      %v921 = vsel %vm596, %v916, 0
      %923 = vmatpush.bf16.msra.mxu0 0
      %924 = vmatpush.bf16.msra.mxu0 0
      %925 = vmatpush.bf16.msra.mxu0 0
      %926 = vmatpush.bf16.msra.mxu0 0
      %927 = vmatpush.bf16.msra.mxu0 0
      %928 = vmatpush.bf16.msra.mxu0 0
      %929 = vmatpush.bf16.msra.mxu0 0
      %930 = vmatpush.bf16.msra.mxu0 %v921
      %931 = vmatmul.bf16.gmra.mxu0 %v918
      %v932 = vpop.f32.mrf.mxu0
      %v933 = vadd.f32 0.0, %v932
      %v934 = vpop.f32.mrf.mxu0
      %935 = vdwg.mxu0
      %937 = vrot.lane.b32.xlu0 %v891, 8
      %v938 = vpop.permute.xlu0 %937
      %941 = vrot.lane.b32.xlu0 %v912, 16
      %v942 = vpop.permute.xlu0 %941
      %945 = vrot.lane.b32.xlu0 %v933, 24
      %v946 = vpop.permute.xlu0 %945
      %v948 = vsel %vm704, %v870, %v938
      %vm949 = vcmask 130048
      %v950 = vsel %vm949, %v948, %v942
      %vm951 = vcmask 195584
      %v952 = vsel %vm951, %v950, %v946
      %v953 = vpack.c.bf16 %v952, %v952
      %v954 = vld [vmem:[%s6] sm:$0xf]
      %v955 = vld [vmem:[%s6 + $0x4] sm:$0xf]
      %v956 = vld [vmem:[%s6 + $0x8] sm:$0xf]
      %v957 = vld [vmem:[%s6 + $0xc] sm:$0xf]
      %v958 = vld [vmem:[%s7] sm:$0x1]
      %v960 = vperm.slane %v958, 0
      %v966 = vunpack.c.l.b16 %v954
      %v967 = vunpack.c.l.b16 %v955
      %v968 = vunpack.c.l.b16 %v956
      %v969 = vunpack.c.l.b16 %v957
      %v970 = vpack.c.b16 %v967, %v966
      %v971 = vpack.c.b16 %v969, %v968
      %v975 = vsel %vm614, %v953, 0
      %977 = vmatpush.bf16.msra.mxu0 0
      %978 = vmatpush.bf16.msra.mxu0 0
      %979 = vmatpush.bf16.msra.mxu0 0
      %980 = vmatpush.bf16.msra.mxu0 0
      %981 = vmatpush.bf16.msra.mxu0 0
      %982 = vmatpush.bf16.msra.mxu0 0
      %983 = vmatpush.bf16.msra.mxu0 %v971
      %984 = vmatpush.bf16.msra.mxu0 %v970
      %985 = vmatmul.bf16.gmra.mxu0 %v975
      %v986 = vpop.f32.mrf.mxu0
      %v987 = vadd.f32 %v960, %v986
      %v988 = vpop.f32.mrf.mxu0
      %989 = vdwg.mxu0
      %v990 = vadd.f32 %v605, %v987
      %v991 = vld [vmem:[%s8] sm:$0x1]
      %v992 = vld [vmem:[%s9] sm:$0x1]
      %v993 = vsel %vm614, %v990, 0.0
      %994 = vadd.xlane.f32.xlu0 %v993
      %v995 = vpop.xlane.xlu0 %994
      %v996 = vmul.f32 %v995, %v624
      %v997 = vsub.f32 %v990, %v996
      %v998 = vmul.f32 %v997, %v997
      %v999 = vsel %vm614, %v998, 0.0
      %1000 = vadd.xlane.f32.xlu0 %v999
      %v1001 = vpop.xlane.xlu0 %1000
      %v1002 = vmul.f32 %v1001, %v624
      %v1003 = vadd.f32 %v1002, 1e-05
      %v1004 = vrsqrt.pop %v1003
      %v1005 = vmul.f32 %v1004, %v1003
      %v1006 = vmul.f32 %v1005, %v1004
      %v1007 = vmul.f32 0.5, %v1006
      %v1008 = vsub.f32 1.5, %v1007
      %v1009 = vmul.f32 %v1004, %v1008
      %vm1010 = vweird.f32 %v1003
      %vm1011 = vweird.f32 %v1004
      %vm1012 = vmor %vm1010, %vm1011
      %v1013 = vsel %vm1012, %v1004, %v1009
      %v1014 = vmul.f32 %v997, %v1013
      %v1016 = vperm.slane %v991, 0
      %v1018 = vmul.f32 %v1014, %v1016
      %v1020 = vperm.slane %v992, 0
      %v1022 = vadd.f32 %v1018, %v1020
      %v1023 = vpack.c.bf16 %v1022, %v1022
      %v1024 = vld [vmem:[%s10] sm:$0xf]
      %v1025 = vld [vmem:[%s10 + $0x4] sm:$0xf]
      %v1026 = vld [vmem:[%s10 + $0x8] sm:$0xf]
      %v1027 = vld [vmem:[%s10 + $0xc] sm:$0xf]
      %v1028 = vld [vmem:[%s11] sm:$0x1]
      %v1030 = vperm.slane %v1028, 0
      %v1036 = vunpack.c.l.b16 %v1024
      %v1037 = vunpack.c.l.b16 %v1025
      %v1038 = vunpack.c.l.b16 %v1026
      %v1039 = vunpack.c.l.b16 %v1027
      %v1040 = vpack.c.b16 %v1037, %v1036
      %v1041 = vpack.c.b16 %v1039, %v1038
      %v1045 = vsel %vm614, %v1023, 0
      %1047 = vmatpush.bf16.msra.mxu0 0
      %1048 = vmatpush.bf16.msra.mxu0 0
      %1049 = vmatpush.bf16.msra.mxu0 0
      %1050 = vmatpush.bf16.msra.mxu0 0
      %1051 = vmatpush.bf16.msra.mxu0 0
      %1052 = vmatpush.bf16.msra.mxu0 0
      %1053 = vmatpush.bf16.msra.mxu0 %v1041
      %1054 = vmatpush.bf16.msra.mxu0 %v1040
      %1055 = vmatmul.bf16.gmra.mxu0 %v1045
      %v1056 = vpop.f32.mrf.mxu0
      %v1057 = vadd.f32 %v1030, %v1056
      %v1058 = vpop.f32.mrf.mxu0
      %1059 = vdwg.mxu0
      %v1060 = vmax.f32 %v1057, 0.0
      %v1061 = vpack.c.bf16 %v1060, %v1060
      %v1062 = vld [vmem:[%s12] sm:$0xf]
      %v1063 = vld [vmem:[%s12 + $0x4] sm:$0xf]
      %v1064 = vld [vmem:[%s12 + $0x8] sm:$0xf]
      %v1065 = vld [vmem:[%s12 + $0xc] sm:$0xf]
      %v1066 = vld [vmem:[%s12 + $0x10] sm:$0xf]
      %v1067 = vld [vmem:[%s12 + $0x14] sm:$0xf]
      %v1068 = vld [vmem:[%s12 + $0x18] sm:$0xf]
      %v1069 = vld [vmem:[%s12 + $0x1c] sm:$0xf]
      %v1070 = vld [vmem:[%s12 + $0x20] sm:$0xf]
      %v1071 = vld [vmem:[%s12 + $0x24] sm:$0xf]
      %v1072 = vld [vmem:[%s12 + $0x28] sm:$0xf]
      %v1073 = vld [vmem:[%s12 + $0x2c] sm:$0xf]
      %v1074 = vld [vmem:[%s12 + $0x30] sm:$0xf]
      %v1075 = vld [vmem:[%s12 + $0x34] sm:$0xf]
      %v1076 = vld [vmem:[%s12 + $0x38] sm:$0xf]
      %v1077 = vld [vmem:[%s12 + $0x3c] sm:$0xf]
      %v1094 = vunpack.c.l.b16 %v1062
      %v1095 = vunpack.c.l.b16 %v1063
      %v1096 = vunpack.c.l.b16 %v1064
      %v1097 = vunpack.c.l.b16 %v1065
      %v1098 = vunpack.c.l.b16 %v1066
      %v1099 = vunpack.c.l.b16 %v1067
      %v1100 = vunpack.c.l.b16 %v1068
      %v1101 = vunpack.c.l.b16 %v1069
      %v1102 = vunpack.c.l.b16 %v1070
      %v1103 = vunpack.c.l.b16 %v1071
      %v1104 = vunpack.c.l.b16 %v1072
      %v1105 = vunpack.c.l.b16 %v1073
      %v1106 = vunpack.c.l.b16 %v1074
      %v1107 = vunpack.c.l.b16 %v1075
      %v1108 = vunpack.c.l.b16 %v1076
      %v1109 = vunpack.c.l.b16 %v1077
      %v1110 = vpack.c.b16 %v1095, %v1094
      %v1111 = vpack.c.b16 %v1097, %v1096
      %v1112 = vpack.c.b16 %v1099, %v1098
      %v1113 = vpack.c.b16 %v1101, %v1100
      %v1114 = vpack.c.b16 %v1103, %v1102
      %v1115 = vpack.c.b16 %v1105, %v1104
      %v1116 = vpack.c.b16 %v1107, %v1106
      %v1117 = vpack.c.b16 %v1109, %v1108
      %1126 = vmatpush.bf16.msra.mxu0 %v1117
      %1127 = vmatpush.bf16.msra.mxu0 %v1116
      %1128 = vmatpush.bf16.msra.mxu0 %v1115
      %1129 = vmatpush.bf16.msra.mxu0 %v1114
      %1130 = vmatpush.bf16.msra.mxu0 %v1113
      %1131 = vmatpush.bf16.msra.mxu0 %v1112
      %1132 = vmatpush.bf16.msra.mxu0 %v1111
      %1133 = vmatpush.bf16.msra.mxu0 %v1110
      %1134 = vmatmul.bf16.gmra.mxu0 %v1061
      %v1135 = vpop.f32.mrf.mxu0
      %v1136 = vadd.f32 0.0, %v1135
      %v1137 = vpop.f32.mrf.mxu0
      %1138 = vdwg.mxu0
      %v1139 = vadd.f32 %v990, %v1136
      %v1140 = vld [vmem:[%s13] sm:$0x1]
      %v1142 = vperm.slane %v1140, 0
      %v1144 = vadd.f32 %v1139, %v1142
      %s1145 = scalar_lea.vmem %s3, 1
      %v1146 = vld [vmem:[%s1145] sm:$0x1]
      %s1147 = scalar_lea.vmem %s4, 1
      %v1148 = vld [vmem:[%s1147] sm:$0x1]
      %v1149 = vsel %vm614, %v1144, 0.0
      %1150 = vadd.xlane.f32.xlu0 %v1149
      %v1151 = vpop.xlane.xlu0 %1150
      %v1152 = vmul.f32 %v1151, %v624
      %v1153 = vsub.f32 %v1144, %v1152
      %v1154 = vmul.f32 %v1153, %v1153
      %v1155 = vsel %vm614, %v1154, 0.0
      %1156 = vadd.xlane.f32.xlu0 %v1155
      %v1157 = vpop.xlane.xlu0 %1156
      %v1158 = vmul.f32 %v1157, %v624
      %v1159 = vadd.f32 %v1158, 1e-05
      %v1160 = vrsqrt.pop %v1159
      %v1161 = vmul.f32 %v1160, %v1159
      %v1162 = vmul.f32 %v1161, %v1160
      %v1163 = vmul.f32 0.5, %v1162
      %v1164 = vsub.f32 1.5, %v1163
      %v1165 = vmul.f32 %v1160, %v1164
      %vm1166 = vweird.f32 %v1159
      %vm1167 = vweird.f32 %v1160
      %vm1168 = vmor %vm1166, %vm1167
      %v1169 = vsel %vm1168, %v1160, %v1165
      %v1170 = vmul.f32 %v1153, %v1169
      %v1172 = vperm.slane %v1146, 0
      %v1174 = vmul.f32 %v1170, %v1172
      %v1176 = vperm.slane %v1148, 0
      %v1178 = vadd.f32 %v1174, %v1176
      %v1179 = vpack.c.bf16 %v1178, %v1178
      %s1180 = scalar_lea.vmem %s5, 16
      %v1181 = vld [vmem:[%s1180] sm:$0xf]
      %v1182 = vld [vmem:[%s1180 + $0x4] sm:$0xf]
      %v1183 = vld [vmem:[%s1180 + $0x8] sm:$0xf]
      %v1184 = vld [vmem:[%s1180 + $0xc] sm:$0xf]
      %v1189 = vunpack.c.l.b16 %v1181
      %v1190 = vunpack.c.l.b16 %v1182
      %v1191 = vunpack.c.l.b16 %v1183
      %v1192 = vunpack.c.l.b16 %v1184
      %v1193 = vpack.c.b16 %v1190, %v1189
      %v1194 = vpack.c.b16 %v1192, %v1191
      %v1198 = vsel %vm614, %v1179, 0
      %1200 = vmatpush.bf16.msra.mxu0 0
      %1201 = vmatpush.bf16.msra.mxu0 0
      %1202 = vmatpush.bf16.msra.mxu0 0
      %1203 = vmatpush.bf16.msra.mxu0 0
      %1204 = vmatpush.bf16.msra.mxu0 0
      %1205 = vmatpush.bf16.msra.mxu0 0
      %1206 = vmatpush.bf16.msra.mxu0 %v1194
      %1207 = vmatpush.bf16.msra.mxu0 %v1193
      %1208 = vmatmul.bf16.gmra.mxu0 %v1198
      %v1209 = vpop.f32.mrf.mxu0
      %v1210 = vadd.f32 0.0, %v1209
      %v1211 = vpop.f32.mrf.mxu0
      %1212 = vdwg.mxu0
      %1214 = vrot.lane.b32.xlu0 %v1210, 120
      %v1215 = vpop.permute.xlu0 %1214
      %1217 = vrot.lane.b32.xlu0 %v1210, 112
      %v1218 = vpop.permute.xlu0 %1217
      %1220 = vrot.lane.b32.xlu0 %v1210, 104
      %v1221 = vpop.permute.xlu0 %1220
      %v1223 = vpack.c.bf16 %v1210, %v1210
      %v1224 = vpack.c.bf16 %v1215, %v1215
      %v1225 = vpack.c.bf16 %v1218, %v1218
      %v1226 = vpack.c.bf16 %v1221, %v1221
      %v1228 = vunpack.c.l.b16 %v1223
      %v1229 = vpack.c.b16 %v1228, %v1228
      %1230 = vrot.lane.b32.xlu0 %v1229, 96
      %v1231 = vpop.permute.xlu0 %1230
      %v1233 = vsel %vm704, %v1223, 0
      %v1236 = vsel %vm704, %v1231, 0
      %1238 = vmatpush.bf16.xpose.msra.mxu0 0
      %1239 = vmatpush.bf16.xpose.msra.mxu0 0
      %1240 = vmatpush.bf16.xpose.msra.mxu0 0
      %1241 = vmatpush.bf16.xpose.msra.mxu0 0
      %1242 = vmatpush.bf16.xpose.msra.mxu0 0
      %1243 = vmatpush.bf16.xpose.msra.mxu0 0
      %1244 = vmatpush.bf16.xpose.msra.mxu0 0
      %1245 = vmatpush.bf16.xpose.msra.mxu0 %v1236
      %1246 = vmatmul.bf16.gmra.mxu0 %v1233
      %v1247 = vpop.f32.mrf.mxu0
      %v1248 = vadd.f32 0.0, %v1247
      %v1249 = vpop.f32.mrf.mxu0
      %1250 = vdwg.mxu0
      %v1252 = vunpack.c.l.b16 %v1224
      %v1253 = vpack.c.b16 %v1252, %v1252
      %1254 = vrot.lane.b32.xlu0 %v1253, 96
      %v1255 = vpop.permute.xlu0 %1254
      %v1257 = vsel %vm704, %v1224, 0
      %v1260 = vsel %vm704, %v1255, 0
      %1262 = vmatpush.bf16.xpose.msra.mxu0 0
      %1263 = vmatpush.bf16.xpose.msra.mxu0 0
      %1264 = vmatpush.bf16.xpose.msra.mxu0 0
      %1265 = vmatpush.bf16.xpose.msra.mxu0 0
      %1266 = vmatpush.bf16.xpose.msra.mxu0 0
      %1267 = vmatpush.bf16.xpose.msra.mxu0 0
      %1268 = vmatpush.bf16.xpose.msra.mxu0 0
      %1269 = vmatpush.bf16.xpose.msra.mxu0 %v1260
      %1270 = vmatmul.bf16.gmra.mxu0 %v1257
      %v1271 = vpop.f32.mrf.mxu0
      %v1272 = vadd.f32 0.0, %v1271
      %v1273 = vpop.f32.mrf.mxu0
      %1274 = vdwg.mxu0
      %v1276 = vunpack.c.l.b16 %v1225
      %v1277 = vpack.c.b16 %v1276, %v1276
      %1278 = vrot.lane.b32.xlu0 %v1277, 96
      %v1279 = vpop.permute.xlu0 %1278
      %v1281 = vsel %vm704, %v1225, 0
      %v1284 = vsel %vm704, %v1279, 0
      %1286 = vmatpush.bf16.xpose.msra.mxu0 0
      %1287 = vmatpush.bf16.xpose.msra.mxu0 0
      %1288 = vmatpush.bf16.xpose.msra.mxu0 0
      %1289 = vmatpush.bf16.xpose.msra.mxu0 0
      %1290 = vmatpush.bf16.xpose.msra.mxu0 0
      %1291 = vmatpush.bf16.xpose.msra.mxu0 0
      %1292 = vmatpush.bf16.xpose.msra.mxu0 0
      %1293 = vmatpush.bf16.xpose.msra.mxu0 %v1284
      %1294 = vmatmul.bf16.gmra.mxu0 %v1281
      %v1295 = vpop.f32.mrf.mxu0
      %v1296 = vadd.f32 0.0, %v1295
      %v1297 = vpop.f32.mrf.mxu0
      %1298 = vdwg.mxu0
      %v1300 = vunpack.c.l.b16 %v1226
      %v1301 = vpack.c.b16 %v1300, %v1300
      %1302 = vrot.lane.b32.xlu0 %v1301, 96
      %v1303 = vpop.permute.xlu0 %1302
      %v1305 = vsel %vm704, %v1226, 0
      %v1308 = vsel %vm704, %v1303, 0
      %1310 = vmatpush.bf16.xpose.msra.mxu0 0
      %1311 = vmatpush.bf16.xpose.msra.mxu0 0
      %1312 = vmatpush.bf16.xpose.msra.mxu0 0
      %1313 = vmatpush.bf16.xpose.msra.mxu0 0
      %1314 = vmatpush.bf16.xpose.msra.mxu0 0
      %1315 = vmatpush.bf16.xpose.msra.mxu0 0
      %1316 = vmatpush.bf16.xpose.msra.mxu0 0
      %1317 = vmatpush.bf16.xpose.msra.mxu0 %v1308
      %1318 = vmatmul.bf16.gmra.mxu0 %v1305
      %v1319 = vpop.f32.mrf.mxu0
      %v1320 = vadd.f32 0.0, %v1319
      %v1321 = vpop.f32.mrf.mxu0
      %1322 = vdwg.mxu0
      %v1323 = vmul.f32 %v1248, 0.35355338
      %v1324 = vmul.f32 %v1272, 0.35355338
      %v1325 = vmul.f32 %v1296, 0.35355338
      %v1326 = vmul.f32 %v1320, 0.35355338
      %v1327 = vadd.f32 %v1323, %v611
      %v1328 = vadd.f32 %v1324, %v611
      %v1329 = vadd.f32 %v1325, %v611
      %v1330 = vadd.f32 %v1326, %v611
      %v1331 = vsel %vm704, %v1327, -inf
      %1332 = vmax.xlane.f32.xlu0 %v1331
      %v1333 = vpop.xlane.xlu0 %1332
      %v1334 = vsel %vm704, %v1328, -inf
      %1335 = vmax.xlane.f32.xlu0 %v1334
      %v1336 = vpop.xlane.xlu0 %1335
      %v1337 = vsel %vm704, %v1329, -inf
      %1338 = vmax.xlane.f32.xlu0 %v1337
      %v1339 = vpop.xlane.xlu0 %1338
      %v1340 = vsel %vm704, %v1330, -inf
      %1341 = vmax.xlane.f32.xlu0 %v1340
      %v1342 = vpop.xlane.xlu0 %1341
      %v1343 = vsub.f32 %v1327, %v1333
      %v1344 = vsub.f32 %v1328, %v1336
      %v1345 = vsub.f32 %v1329, %v1339
      %v1346 = vsub.f32 %v1330, %v1342
      %v1347 = vmul.f32 %v1343, 1.442695
      %v1348 = vpow.pop %v1347
      %v1349 = vmul.f32 %v1344, 1.442695
      %v1350 = vpow.pop %v1349
      %v1351 = vmul.f32 %v1345, 1.442695
      %v1352 = vpow.pop %v1351
      %v1353 = vmul.f32 %v1346, 1.442695
      %v1354 = vpow.pop %v1353
      %v1355 = vsel %vm704, %v1348, 0.0
      %1356 = vadd.xlane.f32.xlu0 %v1355
      %v1357 = vpop.xlane.xlu0 %1356
      %v1358 = vsel %vm704, %v1350, 0.0
      %1359 = vadd.xlane.f32.xlu0 %v1358
      %v1360 = vpop.xlane.xlu0 %1359
      %v1361 = vsel %vm704, %v1352, 0.0
      %1362 = vadd.xlane.f32.xlu0 %v1361
      %v1363 = vpop.xlane.xlu0 %1362
      %v1364 = vsel %vm704, %v1354, 0.0
      %1365 = vadd.xlane.f32.xlu0 %v1364
      %v1366 = vpop.xlane.xlu0 %1365
      %v1367 = vrcp.pop %v1357
      %v1368 = vrcp.pop %v1360
      %v1369 = vrcp.pop %v1363
      %v1370 = vrcp.pop %v1366
      %v1371 = vmul.f32 %v1348, %v1367
      %v1372 = vmul.f32 %v1350, %v1368
      %v1373 = vmul.f32 %v1352, %v1369
      %v1374 = vmul.f32 %v1354, %v1370
      %v1375 = vpack.c.bf16 %v1371, %v1371
      %v1376 = vpack.c.bf16 %v1372, %v1372
      %v1377 = vpack.c.bf16 %v1373, %v1373
      %v1378 = vpack.c.bf16 %v1374, %v1374
      %1379 = vrot.lane.b32.xlu0 %v1229, 64
      %v1380 = vpop.permute.xlu0 %1379
      %v1382 = vsel %vm704, %v1375, 0
      %v1385 = vsel %vm596, %v1380, 0
      %1387 = vmatpush.bf16.msra.mxu0 0
      %1388 = vmatpush.bf16.msra.mxu0 0
      %1389 = vmatpush.bf16.msra.mxu0 0
      %1390 = vmatpush.bf16.msra.mxu0 0
      %1391 = vmatpush.bf16.msra.mxu0 0
      %1392 = vmatpush.bf16.msra.mxu0 0
      %1393 = vmatpush.bf16.msra.mxu0 0
      %1394 = vmatpush.bf16.msra.mxu0 %v1385
      %1395 = vmatmul.bf16.gmra.mxu0 %v1382
      %v1396 = vpop.f32.mrf.mxu0
      %v1397 = vadd.f32 0.0, %v1396
      %v1398 = vpop.f32.mrf.mxu0
      %1399 = vdwg.mxu0
      %1400 = vrot.lane.b32.xlu0 %v1253, 64
      %v1401 = vpop.permute.xlu0 %1400
      %v1403 = vsel %vm704, %v1376, 0
      %v1406 = vsel %vm596, %v1401, 0
      %1408 = vmatpush.bf16.msra.mxu0 0
      %1409 = vmatpush.bf16.msra.mxu0 0
      %1410 = vmatpush.bf16.msra.mxu0 0
      %1411 = vmatpush.bf16.msra.mxu0 0
      %1412 = vmatpush.bf16.msra.mxu0 0
      %1413 = vmatpush.bf16.msra.mxu0 0
      %1414 = vmatpush.bf16.msra.mxu0 0
      %1415 = vmatpush.bf16.msra.mxu0 %v1406
      %1416 = vmatmul.bf16.gmra.mxu0 %v1403
      %v1417 = vpop.f32.mrf.mxu0
      %v1418 = vadd.f32 0.0, %v1417
      %v1419 = vpop.f32.mrf.mxu0
      %1420 = vdwg.mxu0
      %1421 = vrot.lane.b32.xlu0 %v1277, 64
      %v1422 = vpop.permute.xlu0 %1421
      %v1424 = vsel %vm704, %v1377, 0
      %v1427 = vsel %vm596, %v1422, 0
      %1429 = vmatpush.bf16.msra.mxu0 0
      %1430 = vmatpush.bf16.msra.mxu0 0
      %1431 = vmatpush.bf16.msra.mxu0 0
      %1432 = vmatpush.bf16.msra.mxu0 0
      %1433 = vmatpush.bf16.msra.mxu0 0
      %1434 = vmatpush.bf16.msra.mxu0 0
      %1435 = vmatpush.bf16.msra.mxu0 0
      %1436 = vmatpush.bf16.msra.mxu0 %v1427
      %1437 = vmatmul.bf16.gmra.mxu0 %v1424
      %v1438 = vpop.f32.mrf.mxu0
      %v1439 = vadd.f32 0.0, %v1438
      %v1440 = vpop.f32.mrf.mxu0
      %1441 = vdwg.mxu0
      %1442 = vrot.lane.b32.xlu0 %v1301, 64
      %v1443 = vpop.permute.xlu0 %1442
      %v1445 = vsel %vm704, %v1378, 0
      %v1448 = vsel %vm596, %v1443, 0
      %1450 = vmatpush.bf16.msra.mxu0 0
      %1451 = vmatpush.bf16.msra.mxu0 0
      %1452 = vmatpush.bf16.msra.mxu0 0
      %1453 = vmatpush.bf16.msra.mxu0 0
      %1454 = vmatpush.bf16.msra.mxu0 0
      %1455 = vmatpush.bf16.msra.mxu0 0
      %1456 = vmatpush.bf16.msra.mxu0 0
      %1457 = vmatpush.bf16.msra.mxu0 %v1448
      %1458 = vmatmul.bf16.gmra.mxu0 %v1445
      %v1459 = vpop.f32.mrf.mxu0
      %v1460 = vadd.f32 0.0, %v1459
      %v1461 = vpop.f32.mrf.mxu0
      %1462 = vdwg.mxu0
      %1464 = vrot.lane.b32.xlu0 %v1418, 8
      %v1465 = vpop.permute.xlu0 %1464
      %1468 = vrot.lane.b32.xlu0 %v1439, 16
      %v1469 = vpop.permute.xlu0 %1468
      %1472 = vrot.lane.b32.xlu0 %v1460, 24
      %v1473 = vpop.permute.xlu0 %1472
      %v1475 = vsel %vm704, %v1397, %v1465
      %v1476 = vsel %vm949, %v1475, %v1469
      %v1477 = vsel %vm951, %v1476, %v1473
      %v1478 = vpack.c.bf16 %v1477, %v1477
      %s1479 = scalar_lea.vmem %s6, 16
      %v1480 = vld [vmem:[%s1479] sm:$0xf]
      %v1481 = vld [vmem:[%s1479 + $0x4] sm:$0xf]
      %v1482 = vld [vmem:[%s1479 + $0x8] sm:$0xf]
      %v1483 = vld [vmem:[%s1479 + $0xc] sm:$0xf]
      %s1484 = scalar_lea.vmem %s7, 1
      %v1485 = vld [vmem:[%s1484] sm:$0x1]
      %v1487 = vperm.slane %v1485, 0
      %v1493 = vunpack.c.l.b16 %v1480
      %v1494 = vunpack.c.l.b16 %v1481
      %v1495 = vunpack.c.l.b16 %v1482
      %v1496 = vunpack.c.l.b16 %v1483
      %v1497 = vpack.c.b16 %v1494, %v1493
      %v1498 = vpack.c.b16 %v1496, %v1495
      %v1502 = vsel %vm614, %v1478, 0
      %1504 = vmatpush.bf16.msra.mxu0 0
      %1505 = vmatpush.bf16.msra.mxu0 0
      %1506 = vmatpush.bf16.msra.mxu0 0
      %1507 = vmatpush.bf16.msra.mxu0 0
      %1508 = vmatpush.bf16.msra.mxu0 0
      %1509 = vmatpush.bf16.msra.mxu0 0
      %1510 = vmatpush.bf16.msra.mxu0 %v1498
      %1511 = vmatpush.bf16.msra.mxu0 %v1497
      %1512 = vmatmul.bf16.gmra.mxu0 %v1502
      %v1513 = vpop.f32.mrf.mxu0
      %v1514 = vadd.f32 %v1487, %v1513
      %v1515 = vpop.f32.mrf.mxu0
      %1516 = vdwg.mxu0
      %v1517 = vadd.f32 %v1144, %v1514
      %s1518 = scalar_lea.vmem %s8, 1
      %v1519 = vld [vmem:[%s1518] sm:$0x1]
      %s1520 = scalar_lea.vmem %s9, 1
      %v1521 = vld [vmem:[%s1520] sm:$0x1]
      %v1522 = vsel %vm614, %v1517, 0.0
      %1523 = vadd.xlane.f32.xlu0 %v1522
      %v1524 = vpop.xlane.xlu0 %1523
      %v1525 = vmul.f32 %v1524, %v624
      %v1526 = vsub.f32 %v1517, %v1525
      %v1527 = vmul.f32 %v1526, %v1526
      %v1528 = vsel %vm614, %v1527, 0.0
      %1529 = vadd.xlane.f32.xlu0 %v1528
      %v1530 = vpop.xlane.xlu0 %1529
      %v1531 = vmul.f32 %v1530, %v624
      %v1532 = vadd.f32 %v1531, 1e-05
      %v1533 = vrsqrt.pop %v1532
      %v1534 = vmul.f32 %v1533, %v1532
      %v1535 = vmul.f32 %v1534, %v1533
      %v1536 = vmul.f32 0.5, %v1535
      %v1537 = vsub.f32 1.5, %v1536
      %v1538 = vmul.f32 %v1533, %v1537
      %vm1539 = vweird.f32 %v1532
      %vm1540 = vweird.f32 %v1533
      %vm1541 = vmor %vm1539, %vm1540
      %v1542 = vsel %vm1541, %v1533, %v1538
      %v1543 = vmul.f32 %v1526, %v1542
      %v1545 = vperm.slane %v1519, 0
      %v1547 = vmul.f32 %v1543, %v1545
      %v1549 = vperm.slane %v1521, 0
      %v1551 = vadd.f32 %v1547, %v1549
      %v1552 = vpack.c.bf16 %v1551, %v1551
      %s1553 = scalar_lea.vmem %s10, 16
      %v1554 = vld [vmem:[%s1553] sm:$0xf]
      %v1555 = vld [vmem:[%s1553 + $0x4] sm:$0xf]
      %v1556 = vld [vmem:[%s1553 + $0x8] sm:$0xf]
      %v1557 = vld [vmem:[%s1553 + $0xc] sm:$0xf]
      %s1558 = scalar_lea.vmem %s11, 1
      %v1559 = vld [vmem:[%s1558] sm:$0x1]
      %v1561 = vperm.slane %v1559, 0
      %v1567 = vunpack.c.l.b16 %v1554
      %v1568 = vunpack.c.l.b16 %v1555
      %v1569 = vunpack.c.l.b16 %v1556
      %v1570 = vunpack.c.l.b16 %v1557
      %v1571 = vpack.c.b16 %v1568, %v1567
      %v1572 = vpack.c.b16 %v1570, %v1569
      %v1576 = vsel %vm614, %v1552, 0
      %1578 = vmatpush.bf16.msra.mxu0 0
      %1579 = vmatpush.bf16.msra.mxu0 0
      %1580 = vmatpush.bf16.msra.mxu0 0
      %1581 = vmatpush.bf16.msra.mxu0 0
      %1582 = vmatpush.bf16.msra.mxu0 0
      %1583 = vmatpush.bf16.msra.mxu0 0
      %1584 = vmatpush.bf16.msra.mxu0 %v1572
      %1585 = vmatpush.bf16.msra.mxu0 %v1571
      %1586 = vmatmul.bf16.gmra.mxu0 %v1576
      %v1587 = vpop.f32.mrf.mxu0
      %v1588 = vadd.f32 %v1561, %v1587
      %v1589 = vpop.f32.mrf.mxu0
      %1590 = vdwg.mxu0
      %v1591 = vmax.f32 %v1588, 0.0
      %v1592 = vpack.c.bf16 %v1591, %v1591
      %s1593 = scalar_lea.vmem %s12, 64
      %v1594 = vld [vmem:[%s1593] sm:$0xf]
      %v1595 = vld [vmem:[%s1593 + $0x4] sm:$0xf]
      %v1596 = vld [vmem:[%s1593 + $0x8] sm:$0xf]
      %v1597 = vld [vmem:[%s1593 + $0xc] sm:$0xf]
      %v1598 = vld [vmem:[%s1593 + $0x10] sm:$0xf]
      %v1599 = vld [vmem:[%s1593 + $0x14] sm:$0xf]
      %v1600 = vld [vmem:[%s1593 + $0x18] sm:$0xf]
      %v1601 = vld [vmem:[%s1593 + $0x1c] sm:$0xf]
      %v1602 = vld [vmem:[%s1593 + $0x20] sm:$0xf]
      %v1603 = vld [vmem:[%s1593 + $0x24] sm:$0xf]
      %v1604 = vld [vmem:[%s1593 + $0x28] sm:$0xf]
      %v1605 = vld [vmem:[%s1593 + $0x2c] sm:$0xf]
      %v1606 = vld [vmem:[%s1593 + $0x30] sm:$0xf]
      %v1607 = vld [vmem:[%s1593 + $0x34] sm:$0xf]
      %v1608 = vld [vmem:[%s1593 + $0x38] sm:$0xf]
      %v1609 = vld [vmem:[%s1593 + $0x3c] sm:$0xf]
      %v1626 = vunpack.c.l.b16 %v1594
      %v1627 = vunpack.c.l.b16 %v1595
      %v1628 = vunpack.c.l.b16 %v1596
      %v1629 = vunpack.c.l.b16 %v1597
      %v1630 = vunpack.c.l.b16 %v1598
      %v1631 = vunpack.c.l.b16 %v1599
      %v1632 = vunpack.c.l.b16 %v1600
      %v1633 = vunpack.c.l.b16 %v1601
      %v1634 = vunpack.c.l.b16 %v1602
      %v1635 = vunpack.c.l.b16 %v1603
      %v1636 = vunpack.c.l.b16 %v1604
      %v1637 = vunpack.c.l.b16 %v1605
      %v1638 = vunpack.c.l.b16 %v1606
      %v1639 = vunpack.c.l.b16 %v1607
      %v1640 = vunpack.c.l.b16 %v1608
      %v1641 = vunpack.c.l.b16 %v1609
      %v1642 = vpack.c.b16 %v1627, %v1626
      %v1643 = vpack.c.b16 %v1629, %v1628
      %v1644 = vpack.c.b16 %v1631, %v1630
      %v1645 = vpack.c.b16 %v1633, %v1632
      %v1646 = vpack.c.b16 %v1635, %v1634
      %v1647 = vpack.c.b16 %v1637, %v1636
      %v1648 = vpack.c.b16 %v1639, %v1638
      %v1649 = vpack.c.b16 %v1641, %v1640
      %1658 = vmatpush.bf16.msra.mxu0 %v1649
      %1659 = vmatpush.bf16.msra.mxu0 %v1648
      %1660 = vmatpush.bf16.msra.mxu0 %v1647
      %1661 = vmatpush.bf16.msra.mxu0 %v1646
      %1662 = vmatpush.bf16.msra.mxu0 %v1645
      %1663 = vmatpush.bf16.msra.mxu0 %v1644
      %1664 = vmatpush.bf16.msra.mxu0 %v1643
      %1665 = vmatpush.bf16.msra.mxu0 %v1642
      %1666 = vmatmul.bf16.gmra.mxu0 %v1592
      %v1667 = vpop.f32.mrf.mxu0
      %v1668 = vadd.f32 0.0, %v1667
      %v1669 = vpop.f32.mrf.mxu0
      %1670 = vdwg.mxu0
      %v1671 = vadd.f32 %v1517, %v1668
      %s1672 = scalar_lea.vmem %s13, 1
      %v1673 = vld [vmem:[%s1672] sm:$0x1]
      %v1675 = vperm.slane %v1673, 0
      %v1677 = vadd.f32 %v1671, %v1675
      %v1678 = vld [vmem:[%s14] sm:$0x1]
      %v1679 = vld [vmem:[%s15] sm:$0x1]
      %v1680 = vsel %vm614, %v1677, 0.0
      %1681 = vadd.xlane.f32.xlu0 %v1680
      %v1682 = vpop.xlane.xlu0 %1681
      %v1683 = vmul.f32 %v1682, %v624
      %v1684 = vsub.f32 %v1677, %v1683
      %v1685 = vmul.f32 %v1684, %v1684
      %v1686 = vsel %vm614, %v1685, 0.0
      %1687 = vadd.xlane.f32.xlu0 %v1686
      %v1688 = vpop.xlane.xlu0 %1687
      %v1689 = vmul.f32 %v1688, %v624
      %v1690 = vadd.f32 %v1689, 1e-05
      %v1691 = vrsqrt.pop %v1690
      %v1692 = vmul.f32 %v1691, %v1690
      %v1693 = vmul.f32 %v1692, %v1691
      %v1694 = vmul.f32 0.5, %v1693
      %v1695 = vsub.f32 1.5, %v1694
      %v1696 = vmul.f32 %v1691, %v1695
      %vm1697 = vweird.f32 %v1690
      %vm1698 = vweird.f32 %v1691
      %vm1699 = vmor %vm1697, %vm1698
      %v1700 = vsel %vm1699, %v1691, %v1696
      %v1701 = vmul.f32 %v1684, %v1700
      %v1703 = vperm.slane %v1678, 0
      %v1705 = vmul.f32 %v1701, %v1703
      %v1707 = vperm.slane %v1679, 0
      %v1709 = vadd.f32 %v1705, %v1707
      %v1710 = vpack.c.bf16 %v1709, %v1709
      %v1711 = vld [vmem:[%s16] sm:$0xf]
      %v1712 = vld [vmem:[%s16 + $0x4] sm:$0xf]
      %v1713 = vld [vmem:[%s16 + $0x8] sm:$0xf]
      %v1714 = vld [vmem:[%s16 + $0xc] sm:$0xf]
      %v1715 = vld [vmem:[%s17] sm:$0x1]
      %v1717 = vperm.slane %v1715, 0
      %v1723 = vunpack.c.l.b16 %v1711
      %v1724 = vunpack.c.l.b16 %v1712
      %v1725 = vunpack.c.l.b16 %v1713
      %v1726 = vunpack.c.l.b16 %v1714
      %v1727 = vpack.c.b16 %v1724, %v1723
      %v1728 = vpack.c.b16 %v1726, %v1725
      %v1732 = vsel %vm614, %v1710, 0
      %1734 = vmatpush.bf16.msra.mxu0 0
      %1735 = vmatpush.bf16.msra.mxu0 0
      %1736 = vmatpush.bf16.msra.mxu0 0
      %1737 = vmatpush.bf16.msra.mxu0 0
      %1738 = vmatpush.bf16.msra.mxu0 0
      %1739 = vmatpush.bf16.msra.mxu0 0
      %1740 = vmatpush.bf16.msra.mxu0 %v1728
      %1741 = vmatpush.bf16.msra.mxu0 %v1727
      %1742 = vmatmul.bf16.gmra.mxu0 %v1732
      %v1743 = vpop.f32.mrf.mxu0
      %v1744 = vadd.f32 %v1717, %v1743
      %v1745 = vpop.f32.mrf.mxu0
      %1746 = vdwg.mxu0
      %1747 = vst [vmem:[%s535] sm:$0xff] %v1744
      %p1748 = scmp.lt.s32.totalorder %s37, 1
      %s1749 = scalar_select %p1748, %s37, 1
      %s1750 = smul.addr %s1749, 8
      %s1751 = scalar_lea.vmem %s18, %s1750
      // Predicated region
      $region89: #{little_language_model_forward.1} parent=87 // pred_check
        %p1752 = pneg %p412
      $region90: #{little_language_model_forward.1} parent=87 // pred_check_branch
        %1754 = sbr.rel (%p1752) target = $region92
      $region91: #{little_language_model_forward.1} parent=87 // pred_region
        _
      $region92: #{little_language_model_forward.1} parent=87 // pred_fallthru
        _
    $region88: #{little_language_model_forward.1} parent=5 // pred_fallthru
      _
    %p1755 = scmp.le.s32.totalorder 2, %s32
    // Predicated region
    $region93: #{little_language_model_forward.1} parent=5 // pred_check
      %p1756 = pneg %p1755
    $region94: #{little_language_model_forward.1} parent=5 // pred_check_branch
      %1758 = sbr.rel (%p1756) target = $region96
    $region95: #{little_language_model_forward.1} parent=5 // pred_region
      %s1759 = ssub.s32 %s32, 2
      // Predicated region
      $region97: #{little_language_model_forward.1} parent=95 // pred_check
        %p1760 = pneg %p418
      $region98: #{little_language_model_forward.1} parent=95 // pred_check_branch
        %1762 = sbr.rel (%p1760) target = $region100
      $region99: #{little_language_model_forward.1} parent=95 // pred_region
        %p1763 = scmp.lt.s32.totalorder %s38, 1
        %s1764 = scalar_select %p1763, %s38, 1
        %s1765 = smul.addr %s1764, 8
        %s1766 = scalar_lea.vmem %s18, %s1765
      $region100: #{little_language_model_forward.1} parent=95 // pred_fallthru
        _
    $region96: #{little_language_model_forward.1} parent=5 // pred_fallthru
      _
  $region6: #{little_language_model_forward.1} parent=0 // loop_footer
    %s36 = sadd.s32 1, %s32
  $region7: #{little_language_model_forward.1} parent=0 // loop_footer_branch
    %31 = sbr.rel target = $region3
  $region8: #{little_language_model_forward.1} parent=0 // loop_exit
    _

</llo_original>
